<compile_context>
chip_gen: v5e
topology: v5e:2x2
jax: 0.10.0
libtpu: 0.0.40
codegen_flags: <defaults>
</compile_context>

<pallas_src>
import functools
import math

import jax
import jax.numpy as jnp
from jax import lax
from jax.experimental import pallas as pl
from jax.experimental.pallas import tpu as pltpu

LN_EPS = 1e-12
NEG_INF = -1e9
TAG_PAD = 128          # lane-dense padded tag dimension


def _vmem_specs(n):
    return [pl.BlockSpec(memory_space=pltpu.MemorySpace.VMEM) for _ in range(n)]


def _layernorm(x, gamma, beta):
    mu = jnp.mean(x, axis=-1, keepdims=True)
    var = jnp.mean(jnp.square(x - mu), axis=-1, keepdims=True)
    return (x - mu) * lax.rsqrt(var + LN_EPS) * gamma + beta


# ----------------------------------------------------------------------------
# Fused kernel: embeddings+LN -> N encoder layers -> classifier -> masked CE
# ----------------------------------------------------------------------------
def bert_fused_kernel(we_ref, pe_ref, te_ref, emb_ln_ref,
                      maskb_ref, active_ref, tgt_ref,
                      wqkv_ref, bqkv_ref, wo_ref, bo_ref, ln_ref,
                      wi_ref, bi_ref, wo2_ref, bo2_ref,
                      fcw_ref, fcb_ref,
                      em_ref, loss_ref,
                      *, num_layers, num_heads, head_dim, batch, seq):
    B, S = batch, seq
    H = num_heads * head_dim
    BS = B * S
    scale = 1.0 / math.sqrt(head_dim)

    # --- embedding sum + LayerNorm (gathers done in JAX glue) ----------------
    emb_ln = emb_ln_ref[...]                                   # (2, H)
    x = _layernorm(we_ref[...] + pe_ref[...] + te_ref[...],
                   emb_ln[0:1, :], emb_ln[1:2, :])             # (B*S, H)

    attn_bias = (1.0 - maskb_ref[...]) * NEG_INF               # (B, 1, S)

    # --- encoder layers (static unroll, weights stacked on leading axis) ----
    for l in range(num_layers):
        lnp = ln_ref[l]                                        # (4, H)

        # fused QKV projection: one (B*S,H) x (H,3H) MXU op
        qkv = jnp.dot(x, wqkv_ref[l],
                      preferred_element_type=jnp.float32) + bqkv_ref[l]

        ctx_heads = []
        for h in range(num_heads):                             # static unroll
            q = qkv[:, h * head_dim:(h + 1) * head_dim].reshape(B, S, head_dim)
            k = qkv[:, H + h * head_dim:H + (h + 1) * head_dim].reshape(B, S, head_dim)
            v = qkv[:, 2 * H + h * head_dim:2 * H + (h + 1) * head_dim].reshape(B, S, head_dim)
            s = jnp.einsum('bqd,bkd->bqk', q, k,
                           preferred_element_type=jnp.float32) * scale + attn_bias
            m = jnp.max(s, axis=-1, keepdims=True)
            p = jnp.exp(s - m)
            p = p * pl.reciprocal(jnp.sum(p, axis=-1, keepdims=True), approx=True)
            ctx = jnp.einsum('bqk,bkd->bqd', p, v,
                             preferred_element_type=jnp.float32)
            ctx_heads.append(ctx.reshape(BS, head_dim))

        ctx_all = jnp.concatenate(ctx_heads, axis=-1)          # (B*S, H)
        attn_out = jnp.dot(ctx_all, wo_ref[l],
                           preferred_element_type=jnp.float32) + bo_ref[l]
        x = _layernorm(x + attn_out, lnp[0:1, :], lnp[1:2, :])

        hmid = jnp.dot(x, wi_ref[l],
                       preferred_element_type=jnp.float32) + bi_ref[l]
        # TODO(synk): HF BERT uses exact erf-GELU; tanh approximation used here.
        hmid = jax.nn.gelu(hmid, approximate=True)
        ffn_out = jnp.dot(hmid, wo2_ref[l],
                          preferred_element_type=jnp.float32) + bo2_ref[l]
        x = _layernorm(x + ffn_out, lnp[2:3, :], lnp[3:4, :])

    # --- classifier (lane-dense, tag dim padded to 128) + masked CE ----------
    em = jnp.dot(x, fcw_ref[...],
                 preferred_element_type=jnp.float32) + fcb_ref[...]   # (B*S, TP)
    em_ref[...] = em                                                  # unmasked vst

    m = jnp.max(em, axis=-1, keepdims=True)
    lse = m + jnp.log(jnp.sum(jnp.exp(em - m), axis=-1, keepdims=True))

    tgt = tgt_ref[...]                                         # (B*S, 1) int32
    col = lax.broadcasted_iota(jnp.int32, em.shape, 1)
    picked = jnp.sum(jnp.where(col == tgt, em, 0.0), axis=-1, keepdims=True)

    active = active_ref[...]                                   # (B*S, 1) float
    per_tok = (lse - picked) * active
    num = jnp.sum(per_tok, keepdims=True)                      # (1, 1)
    den = jnp.sum(active, keepdims=True)                       # (1, 1)
    loss_ref[...] = num / den


# ----------------------------------------------------------------------------
# Parameters (deterministic, synthetic)
# ----------------------------------------------------------------------------
def init_params(key, *, vocab=100, max_pos=64, type_vocab=2, hidden=32,
                intermediate=64, num_layers=2, num_tags=5):
    keys = jax.random.split(key, 4 + num_layers)
    init = lambda k, shape: (0.02 * jax.random.normal(k, shape)).astype(jnp.float32)
    params = dict(
        word_emb=init(keys[0], (vocab, hidden)),
        pos_emb=init(keys[1], (max_pos, hidden)),
        type_emb=init(keys[2], (type_vocab, hidden)),
        emb_gamma=jnp.ones((hidden,), jnp.float32),
        emb_beta=jnp.zeros((hidden,), jnp.float32),
        fc_w=init(keys[3], (hidden, num_tags)),
        fc_b=jnp.zeros((num_tags,), jnp.float32),
        layers=[],
    )
    for l in range(num_layers):
        lk = jax.random.split(keys[4 + l], 6)
        params['layers'].append(dict(
            wq=init(lk[0], (hidden, hidden)), bq=jnp.zeros((hidden,), jnp.float32),
            wk=init(lk[1], (hidden, hidden)), bk=jnp.zeros((hidden,), jnp.float32),
            wv=init(lk[2], (hidden, hidden)), bv=jnp.zeros((hidden,), jnp.float32),
            wo=init(lk[3], (hidden, hidden)), bo=jnp.zeros((hidden,), jnp.float32),
            g1=jnp.ones((hidden,), jnp.float32), be1=jnp.zeros((hidden,), jnp.float32),
            wi=init(lk[4], (hidden, intermediate)), bi=jnp.zeros((intermediate,), jnp.float32),
            wo2=init(lk[5], (intermediate, hidden)), bo2=jnp.zeros((hidden,), jnp.float32),
            g2=jnp.ones((hidden,), jnp.float32), be2=jnp.zeros((hidden,), jnp.float32),
        ))
    return params


# ----------------------------------------------------------------------------
# Forward wrapper (mirrors Bert.forward -> (emissions, loss))
# ----------------------------------------------------------------------------
def bert_forward(params, input_ids, attention_mask, token_type_ids, target_tags,
                 *, num_heads=2, num_tags=5):
    B, S = input_ids.shape
    H = params['word_emb'].shape[1]
    hd = H // num_heads
    L = len(params['layers'])
    T = num_tags

    # --- embedding gathers (glue), flattened to the kernel (B*S, H) layout ---
    we = jnp.take(params['word_emb'], input_ids.reshape(-1), axis=0)        # (B*S,H)
    pe = jnp.broadcast_to(params['pos_emb'][:S][None, :, :],
                          (B, S, H)).reshape(B * S, H)                      # (B*S,H)
    te = jnp.take(params['type_emb'], token_type_ids.reshape(-1), axis=0)   # (B*S,H)

    emb_ln = jnp.stack([params['emb_gamma'], params['emb_beta']], axis=0)   # (2,H)

    # --- stack per-layer weights on a leading num_layers axis ----------------
    layers = params['layers']
    wqkv = jnp.stack([jnp.concatenate([lp['wq'], lp['wk'], lp['wv']], axis=1)
                      for lp in layers])                                    # (L,H,3H)
    bqkv = jnp.stack([jnp.concatenate([lp['bq'], lp['bk'], lp['bv']])[None]
                      for lp in layers])                                    # (L,1,3H)
    wo = jnp.stack([lp['wo'] for lp in layers])                             # (L,H,H)
    bo = jnp.stack([lp['bo'][None] for lp in layers])                       # (L,1,H)
    ln = jnp.stack([jnp.stack([lp['g1'], lp['be1'], lp['g2'], lp['be2']])
                    for lp in layers])                                      # (L,4,H)
    wi = jnp.stack([lp['wi'] for lp in layers])                             # (L,H,I)
    bi = jnp.stack([lp['bi'][None] for lp in layers])                       # (L,1,I)
    wo2 = jnp.stack([lp['wo2'] for lp in layers])                           # (L,I,H)
    bo2 = jnp.stack([lp['bo2'][None] for lp in layers])                     # (L,1,H)

    # --- lane-dense classifier: pad tag dim T -> TAG_PAD ---------------------
    fc_w = jnp.zeros((H, TAG_PAD), jnp.float32).at[:, :T].set(params['fc_w'])
    fc_b = jnp.full((1, TAG_PAD), NEG_INF, jnp.float32).at[0, :T].set(params['fc_b'])

    maskb = attention_mask.astype(jnp.float32).reshape(B, 1, S)
    active = attention_mask.astype(jnp.float32).reshape(B * S, 1)
    tgt = target_tags.astype(jnp.int32).reshape(B * S, 1)

    kernel = functools.partial(bert_fused_kernel, num_layers=L,
                               num_heads=num_heads, head_dim=hd,
                               batch=B, seq=S)

    em_pad, loss = pl.pallas_call(
        kernel,
        out_shape=(jax.ShapeDtypeStruct((B * S, TAG_PAD), jnp.float32),
                   jax.ShapeDtypeStruct((1, 1), jnp.float32)),
        in_specs=_vmem_specs(18),
        out_specs=tuple(_vmem_specs(2)),
    )(we, pe, te, emb_ln, maskb, active, tgt,
      wqkv, bqkv, wo, bo, ln, wi, bi, wo2, bo2, fc_w, fc_b)

    emissions = em_pad[:, :T].reshape(B, S, T)
    return emissions, loss[0, 0]


if __name__ == "__main__":
    key = jax.random.PRNGKey(0)
    pkey, ikey, tkey, ykey = jax.random.split(key, 4)

    B, S, num_tags, num_heads = 2, 8, 5, 2
    params = init_params(pkey, num_tags=num_tags)

    input_ids = jax.random.randint(ikey, (B, S), 0, 100, dtype=jnp.int32)
    token_type_ids = jax.random.randint(tkey, (B, S), 0, 2, dtype=jnp.int32)
    lengths = jnp.array([8, 5], dtype=jnp.int32)
    attention_mask = (jnp.arange(S)[None, :] < lengths[:, None]).astype(jnp.int32)
    target_tags = jax.random.randint(ykey, (B, S), 0, num_tags, dtype=jnp.int32)

    fwd = jax.jit(lambda ids, am, tt, tg: bert_forward(
        params, ids, am, tt, tg, num_heads=num_heads, num_tags=num_tags))

    emissions, loss = fwd(input_ids, attention_mask, token_type_ids, target_tags)
    jax.block_until_ready((emissions, loss))

    assert emissions.shape == (B, S, num_tags)
    assert loss.shape == ()
    assert bool(jnp.isfinite(loss))
    print("KERNEL_OK")
</pallas_src>

<mosaic_0001>
module attributes {stable_mosaic.version = 11 : i64} {
  func.func @bert_fused_kernel(%arg0: memref<16x32xf32, #tpu.memory_space<vmem>>, %arg1: memref<16x32xf32, #tpu.memory_space<vmem>>, %arg2: memref<16x32xf32, #tpu.memory_space<vmem>>, %arg3: memref<2x32xf32, #tpu.memory_space<vmem>>, %arg4: memref<2x1x8xf32, #tpu.memory_space<vmem>>, %arg5: memref<16x1xf32, #tpu.memory_space<vmem>>, %arg6: memref<16x1xi32, #tpu.memory_space<vmem>>, %arg7: memref<2x32x96xf32, #tpu.memory_space<vmem>>, %arg8: memref<2x1x96xf32, #tpu.memory_space<vmem>>, %arg9: memref<2x32x32xf32, #tpu.memory_space<vmem>>, %arg10: memref<2x1x32xf32, #tpu.memory_space<vmem>>, %arg11: memref<2x4x32xf32, #tpu.memory_space<vmem>>, %arg12: memref<2x32x64xf32, #tpu.memory_space<vmem>>, %arg13: memref<2x1x64xf32, #tpu.memory_space<vmem>>, %arg14: memref<2x64x32xf32, #tpu.memory_space<vmem>>, %arg15: memref<2x1x32xf32, #tpu.memory_space<vmem>>, %arg16: memref<32x128xf32, #tpu.memory_space<vmem>>, %arg17: memref<1x128xf32, #tpu.memory_space<vmem>>, %arg18: memref<16x128xf32, #tpu.memory_space<vmem>>, %arg19: memref<1x1xf32, #tpu.memory_space<vmem>>) attributes {dimension_semantics = [], scalar_prefetch = 0 : i64, scratch_operands = 0 : i64, tpu.core_type = #tpu.core_type<tc>} {
    %c0 = arith.constant 0 : index
    %c0_0 = arith.constant 0 : index
    %0 = vector.load %arg3[%c0, %c0_0] : memref<2x32xf32, #tpu.memory_space<vmem>>, vector<2x32xf32>
    %c0_1 = arith.constant 0 : index
    %c0_2 = arith.constant 0 : index
    %1 = vector.load %arg0[%c0_1, %c0_2] : memref<16x32xf32, #tpu.memory_space<vmem>>, vector<16x32xf32>
    %c0_3 = arith.constant 0 : index
    %c0_4 = arith.constant 0 : index
    %2 = vector.load %arg1[%c0_3, %c0_4] : memref<16x32xf32, #tpu.memory_space<vmem>>, vector<16x32xf32>
    %3 = arith.addf %1, %2 : vector<16x32xf32>
    %c0_5 = arith.constant 0 : index
    %c0_6 = arith.constant 0 : index
    %4 = vector.load %arg2[%c0_5, %c0_6] : memref<16x32xf32, #tpu.memory_space<vmem>>, vector<16x32xf32>
    %5 = arith.addf %3, %4 : vector<16x32xf32>
    %6 = vector.extract_strided_slice %0 {offsets = [0, 0], sizes = [1, 32], strides = [1, 1]} : vector<2x32xf32> to vector<1x32xf32>
    %7 = vector.extract_strided_slice %0 {offsets = [1, 0], sizes = [1, 32], strides = [1, 1]} : vector<2x32xf32> to vector<1x32xf32>
    %cst = arith.constant dense<0.000000e+00> : vector<16xf32>
    %8 = vector.multi_reduction <add>, %5, %cst [1] : vector<16x32xf32> to vector<16xf32>
    %9 = vector.shape_cast %8 : vector<16xf32> to vector<16x1xf32>
    %cst_7 = arith.constant 3.200000e+01 : f32
    %10 = vector.broadcast %cst_7 : f32 to vector<16x1xf32>
    %11 = arith.divf %9, %10 : vector<16x1xf32>
    %12 = vector.broadcast %11 : vector<16x1xf32> to vector<16x32xf32>
    %13 = arith.subf %5, %12 : vector<16x32xf32>
    %14 = arith.mulf %13, %13 : vector<16x32xf32>
    %cst_8 = arith.constant dense<0.000000e+00> : vector<16xf32>
    %15 = vector.multi_reduction <add>, %14, %cst_8 [1] : vector<16x32xf32> to vector<16xf32>
    %16 = vector.shape_cast %15 : vector<16xf32> to vector<16x1xf32>
    %cst_9 = arith.constant 3.200000e+01 : f32
    %17 = vector.broadcast %cst_9 : f32 to vector<16x1xf32>
    %18 = arith.divf %16, %17 : vector<16x1xf32>
    %19 = vector.broadcast %11 : vector<16x1xf32> to vector<16x32xf32>
    %20 = arith.subf %5, %19 : vector<16x32xf32>
    %cst_10 = arith.constant 9.99999996E-13 : f32
    %21 = vector.broadcast %cst_10 : f32 to vector<16x1xf32>
    %22 = arith.addf %18, %21 : vector<16x1xf32>
    %23 = math.rsqrt %22 : vector<16x1xf32>
    %24 = vector.broadcast %23 : vector<16x1xf32> to vector<16x32xf32>
    %25 = arith.mulf %20, %24 : vector<16x32xf32>
    %26 = vector.broadcast %6 : vector<1x32xf32> to vector<16x32xf32>
    %27 = arith.mulf %25, %26 : vector<16x32xf32>
    %28 = vector.broadcast %7 : vector<1x32xf32> to vector<16x32xf32>
    %29 = arith.addf %27, %28 : vector<16x32xf32>
    %c0_11 = arith.constant 0 : index
    %c0_12 = arith.constant 0 : index
    %c0_13 = arith.constant 0 : index
    %30 = vector.load %arg4[%c0_11, %c0_12, %c0_13] : memref<2x1x8xf32, #tpu.memory_space<vmem>>, vector<2x1x8xf32>
    %cst_14 = arith.constant 1.000000e+00 : f32
    %31 = vector.broadcast %cst_14 : f32 to vector<2x1x8xf32>
    %32 = arith.subf %31, %30 : vector<2x1x8xf32>
    %cst_15 = arith.constant -1.000000e+09 : f32
    %33 = vector.broadcast %cst_15 : f32 to vector<2x1x8xf32>
    %34 = arith.mulf %32, %33 : vector<2x1x8xf32>
    %c0_16 = arith.constant 0 : index
    %c0_17 = arith.constant 0 : index
    %c0_18 = arith.constant 0 : index
    %35 = vector.load %arg11[%c0_16, %c0_17, %c0_18] : memref<2x4x32xf32, #tpu.memory_space<vmem>>, vector<1x4x32xf32>
    %36 = vector.shape_cast %35 : vector<1x4x32xf32> to vector<4x32xf32>
    %c0_19 = arith.constant 0 : index
    %c0_20 = arith.constant 0 : index
    %c0_21 = arith.constant 0 : index
    %37 = vector.load %arg7[%c0_19, %c0_20, %c0_21] : memref<2x32x96xf32, #tpu.memory_space<vmem>>, vector<1x32x96xf32>
    %38 = vector.shape_cast %37 : vector<1x32x96xf32> to vector<32x96xf32>
    %cst_22 = arith.constant dense<0.000000e+00> : vector<16x96xf32>
    %39 = tpu.matmul %29, %38, %cst_22 {dimension_numbers = #tpu.dot_dimension_numbers<[1], [0], [0], [1], [0, 0, 1, 1], [], []>} : vector<16x32xf32>, vector<32x96xf32>, vector<16x96xf32> -> vector<16x96xf32>
    %c0_23 = arith.constant 0 : index
    %c0_24 = arith.constant 0 : index
    %c0_25 = arith.constant 0 : index
    %40 = vector.load %arg8[%c0_23, %c0_24, %c0_25] : memref<2x1x96xf32, #tpu.memory_space<vmem>>, vector<1x1x96xf32>
    %41 = vector.shape_cast %40 : vector<1x1x96xf32> to vector<1x96xf32>
    %42 = vector.broadcast %41 : vector<1x96xf32> to vector<16x96xf32>
    %43 = arith.addf %39, %42 : vector<16x96xf32>
    %44 = vector.extract_strided_slice %43 {offsets = [0, 0], sizes = [16, 16], strides = [1, 1]} : vector<16x96xf32> to vector<16x16xf32>
    %45 = vector.shape_cast %44 : vector<16x16xf32> to vector<2x8x16xf32>
    %46 = vector.extract_strided_slice %43 {offsets = [0, 32], sizes = [16, 16], strides = [1, 1]} : vector<16x96xf32> to vector<16x16xf32>
    %47 = vector.shape_cast %46 : vector<16x16xf32> to vector<2x8x16xf32>
    %48 = vector.extract_strided_slice %43 {offsets = [0, 64], sizes = [16, 16], strides = [1, 1]} : vector<16x96xf32> to vector<16x16xf32>
    %49 = vector.shape_cast %48 : vector<16x16xf32> to vector<2x8x16xf32>
    "tpu.trace_start"() <{level = 10 : i32, message = "bqd,bkd->bqk"}> : () -> ()
    %cst_26 = arith.constant dense<0.000000e+00> : vector<2x8x8xf32>
    %50 = tpu.matmul %45, %47, %cst_26 {dimension_numbers = #tpu.dot_dimension_numbers<[2], [2], [1], [1], [0, 0, 0, 1, 1, 1], [0], [0]>} : vector<2x8x16xf32>, vector<2x8x16xf32>, vector<2x8x8xf32> -> vector<2x8x8xf32>
    "tpu.trace_stop"() : () -> ()
    %cst_27 = arith.constant 2.500000e-01 : f32
    %51 = vector.broadcast %cst_27 : f32 to vector<2x8x8xf32>
    %52 = arith.mulf %50, %51 : vector<2x8x8xf32>
    %53 = vector.broadcast %34 : vector<2x1x8xf32> to vector<2x8x8xf32>
    %54 = arith.addf %52, %53 : vector<2x8x8xf32>
    %cst_28 = arith.constant dense<0xFF800000> : vector<2x8xf32>
    %55 = vector.multi_reduction <maximumf>, %54, %cst_28 [2] : vector<2x8x8xf32> to vector<2x8xf32>
    %56 = vector.shape_cast %55 : vector<2x8xf32> to vector<2x8x1xf32>
    %57 = vector.broadcast %56 : vector<2x8x1xf32> to vector<2x8x8xf32>
    %58 = arith.subf %54, %57 : vector<2x8x8xf32>
    %59 = math.exp %58 : vector<2x8x8xf32>
    %cst_29 = arith.constant dense<0.000000e+00> : vector<2x8xf32>
    %60 = vector.multi_reduction <add>, %59, %cst_29 [2] : vector<2x8x8xf32> to vector<2x8xf32>
    %61 = vector.shape_cast %60 : vector<2x8xf32> to vector<2x8x1xf32>
    %62 = tpu.reciprocal %61 {approx = true} : vector<2x8x1xf32> -> vector<2x8x1xf32>
    %63 = vector.broadcast %62 : vector<2x8x1xf32> to vector<2x8x8xf32>
    %64 = arith.mulf %59, %63 : vector<2x8x8xf32>
    "tpu.trace_start"() <{level = 10 : i32, message = "bqk,bkd->bqd"}> : () -> ()
    %cst_30 = arith.constant dense<0.000000e+00> : vector<2x8x16xf32>
    %65 = tpu.matmul %64, %49, %cst_30 {dimension_numbers = #tpu.dot_dimension_numbers<[2], [1], [1], [2], [0, 0, 0, 1, 1, 2], [0], [0]>} : vector<2x8x8xf32>, vector<2x8x16xf32>, vector<2x8x16xf32> -> vector<2x8x16xf32>
    "tpu.trace_stop"() : () -> ()
    %66 = vector.shape_cast %65 : vector<2x8x16xf32> to vector<16x16xf32>
    %67 = vector.extract_strided_slice %43 {offsets = [0, 16], sizes = [16, 16], strides = [1, 1]} : vector<16x96xf32> to vector<16x16xf32>
    %68 = vector.shape_cast %67 : vector<16x16xf32> to vector<2x8x16xf32>
    %69 = vector.extract_strided_slice %43 {offsets = [0, 48], sizes = [16, 16], strides = [1, 1]} : vector<16x96xf32> to vector<16x16xf32>
    %70 = vector.shape_cast %69 : vector<16x16xf32> to vector<2x8x16xf32>
    %71 = vector.extract_strided_slice %43 {offsets = [0, 80], sizes = [16, 16], strides = [1, 1]} : vector<16x96xf32> to vector<16x16xf32>
    %72 = vector.shape_cast %71 : vector<16x16xf32> to vector<2x8x16xf32>
    "tpu.trace_start"() <{level = 10 : i32, message = "bqd,bkd->bqk"}> : () -> ()
    %cst_31 = arith.constant dense<0.000000e+00> : vector<2x8x8xf32>
    %73 = tpu.matmul %68, %70, %cst_31 {dimension_numbers = #tpu.dot_dimension_numbers<[2], [2], [1], [1], [0, 0, 0, 1, 1, 1], [0], [0]>} : vector<2x8x16xf32>, vector<2x8x16xf32>, vector<2x8x8xf32> -> vector<2x8x8xf32>
    "tpu.trace_stop"() : () -> ()
    %cst_32 = arith.constant 2.500000e-01 : f32
    %74 = vector.broadcast %cst_32 : f32 to vector<2x8x8xf32>
    %75 = arith.mulf %73, %74 : vector<2x8x8xf32>
    %76 = vector.broadcast %34 : vector<2x1x8xf32> to vector<2x8x8xf32>
    %77 = arith.addf %75, %76 : vector<2x8x8xf32>
    %cst_33 = arith.constant dense<0xFF800000> : vector<2x8xf32>
    %78 = vector.multi_reduction <maximumf>, %77, %cst_33 [2] : vector<2x8x8xf32> to vector<2x8xf32>
    %79 = vector.shape_cast %78 : vector<2x8xf32> to vector<2x8x1xf32>
    %80 = vector.broadcast %79 : vector<2x8x1xf32> to vector<2x8x8xf32>
    %81 = arith.subf %77, %80 : vector<2x8x8xf32>
    %82 = math.exp %81 : vector<2x8x8xf32>
    %cst_34 = arith.constant dense<0.000000e+00> : vector<2x8xf32>
    %83 = vector.multi_reduction <add>, %82, %cst_34 [2] : vector<2x8x8xf32> to vector<2x8xf32>
    %84 = vector.shape_cast %83 : vector<2x8xf32> to vector<2x8x1xf32>
    %85 = tpu.reciprocal %84 {approx = true} : vector<2x8x1xf32> -> vector<2x8x1xf32>
    %86 = vector.broadcast %85 : vector<2x8x1xf32> to vector<2x8x8xf32>
    %87 = arith.mulf %82, %86 : vector<2x8x8xf32>
    "tpu.trace_start"() <{level = 10 : i32, message = "bqk,bkd->bqd"}> : () -> ()
    %cst_35 = arith.constant dense<0.000000e+00> : vector<2x8x16xf32>
    %88 = tpu.matmul %87, %72, %cst_35 {dimension_numbers = #tpu.dot_dimension_numbers<[2], [1], [1], [2], [0, 0, 0, 1, 1, 2], [0], [0]>} : vector<2x8x8xf32>, vector<2x8x16xf32>, vector<2x8x16xf32> -> vector<2x8x16xf32>
    "tpu.trace_stop"() : () -> ()
    %89 = vector.shape_cast %88 : vector<2x8x16xf32> to vector<16x16xf32>
    %90 = tpu.concatenate %66, %89 in 1 : vector<16x16xf32>, vector<16x16xf32> -> vector<16x32xf32>
    %c0_36 = arith.constant 0 : index
    %c0_37 = arith.constant 0 : index
    %c0_38 = arith.constant 0 : index
    %91 = vector.load %arg9[%c0_36, %c0_37, %c0_38] : memref<2x32x32xf32, #tpu.memory_space<vmem>>, vector<1x32x32xf32>
    %92 = vector.shape_cast %91 : vector<1x32x32xf32> to vector<32x32xf32>
    %cst_39 = arith.constant dense<0.000000e+00> : vector<16x32xf32>
    %93 = tpu.matmul %90, %92, %cst_39 {dimension_numbers = #tpu.dot_dimension_numbers<[1], [0], [0], [1], [0, 0, 1, 1], [], []>} : vector<16x32xf32>, vector<32x32xf32>, vector<16x32xf32> -> vector<16x32xf32>
    %c0_40 = arith.constant 0 : index
    %c0_41 = arith.constant 0 : index
    %c0_42 = arith.constant 0 : index
    %94 = vector.load %arg10[%c0_40, %c0_41, %c0_42] : memref<2x1x32xf32, #tpu.memory_space<vmem>>, vector<1x1x32xf32>
    %95 = vector.shape_cast %94 : vector<1x1x32xf32> to vector<1x32xf32>
    %96 = vector.broadcast %95 : vector<1x32xf32> to vector<16x32xf32>
    %97 = arith.addf %93, %96 : vector<16x32xf32>
    %98 = arith.addf %29, %97 : vector<16x32xf32>
    %99 = vector.extract_strided_slice %36 {offsets = [0, 0], sizes = [1, 32], strides = [1, 1]} : vector<4x32xf32> to vector<1x32xf32>
    %100 = vector.extract_strided_slice %36 {offsets = [1, 0], sizes = [1, 32], strides = [1, 1]} : vector<4x32xf32> to vector<1x32xf32>
    %cst_43 = arith.constant dense<0.000000e+00> : vector<16xf32>
    %101 = vector.multi_reduction <add>, %98, %cst_43 [1] : vector<16x32xf32> to vector<16xf32>
    %102 = vector.shape_cast %101 : vector<16xf32> to vector<16x1xf32>
    %cst_44 = arith.constant 3.200000e+01 : f32
    %103 = vector.broadcast %cst_44 : f32 to vector<16x1xf32>
    %104 = arith.divf %102, %103 : vector<16x1xf32>
    %105 = vector.broadcast %104 : vector<16x1xf32> to vector<16x32xf32>
    %106 = arith.subf %98, %105 : vector<16x32xf32>
    %107 = arith.mulf %106, %106 : vector<16x32xf32>
    %cst_45 = arith.constant dense<0.000000e+00> : vector<16xf32>
    %108 = vector.multi_reduction <add>, %107, %cst_45 [1] : vector<16x32xf32> to vector<16xf32>
    %109 = vector.shape_cast %108 : vector<16xf32> to vector<16x1xf32>
    %cst_46 = arith.constant 3.200000e+01 : f32
    %110 = vector.broadcast %cst_46 : f32 to vector<16x1xf32>
    %111 = arith.divf %109, %110 : vector<16x1xf32>
    %112 = vector.broadcast %104 : vector<16x1xf32> to vector<16x32xf32>
    %113 = arith.subf %98, %112 : vector<16x32xf32>
    %cst_47 = arith.constant 9.99999996E-13 : f32
    %114 = vector.broadcast %cst_47 : f32 to vector<16x1xf32>
    %115 = arith.addf %111, %114 : vector<16x1xf32>
    %116 = math.rsqrt %115 : vector<16x1xf32>
    %117 = vector.broadcast %116 : vector<16x1xf32> to vector<16x32xf32>
    %118 = arith.mulf %113, %117 : vector<16x32xf32>
    %119 = vector.broadcast %99 : vector<1x32xf32> to vector<16x32xf32>
    %120 = arith.mulf %118, %119 : vector<16x32xf32>
    %121 = vector.broadcast %100 : vector<1x32xf32> to vector<16x32xf32>
    %122 = arith.addf %120, %121 : vector<16x32xf32>
    %c0_48 = arith.constant 0 : index
    %c0_49 = arith.constant 0 : index
    %c0_50 = arith.constant 0 : index
    %123 = vector.load %arg12[%c0_48, %c0_49, %c0_50] : memref<2x32x64xf32, #tpu.memory_space<vmem>>, vector<1x32x64xf32>
    %124 = vector.shape_cast %123 : vector<1x32x64xf32> to vector<32x64xf32>
    %cst_51 = arith.constant dense<0.000000e+00> : vector<16x64xf32>
    %125 = tpu.matmul %122, %124, %cst_51 {dimension_numbers = #tpu.dot_dimension_numbers<[1], [0], [0], [1], [0, 0, 1, 1], [], []>} : vector<16x32xf32>, vector<32x64xf32>, vector<16x64xf32> -> vector<16x64xf32>
    %c0_52 = arith.constant 0 : index
    %c0_53 = arith.constant 0 : index
    %c0_54 = arith.constant 0 : index
    %126 = vector.load %arg13[%c0_52, %c0_53, %c0_54] : memref<2x1x64xf32, #tpu.memory_space<vmem>>, vector<1x1x64xf32>
    %127 = vector.shape_cast %126 : vector<1x1x64xf32> to vector<1x64xf32>
    %128 = vector.broadcast %127 : vector<1x64xf32> to vector<16x64xf32>
    %129 = arith.addf %125, %128 : vector<16x64xf32>
    %130 = arith.mulf %129, %129 : vector<16x64xf32>
    %131 = arith.mulf %129, %130 : vector<16x64xf32>
    %cst_55 = arith.constant 4.471500e-02 : f32
    %132 = vector.broadcast %cst_55 : f32 to vector<16x64xf32>
    %133 = arith.mulf %132, %131 : vector<16x64xf32>
    %134 = arith.addf %129, %133 : vector<16x64xf32>
    %cst_56 = arith.constant 0.797884583 : f32
    %135 = vector.broadcast %cst_56 : f32 to vector<16x64xf32>
    %136 = arith.mulf %135, %134 : vector<16x64xf32>
    %137 = math.tanh %136 : vector<16x64xf32>
    %cst_57 = arith.constant 1.000000e+00 : f32
    %138 = vector.broadcast %cst_57 : f32 to vector<16x64xf32>
    %139 = arith.addf %138, %137 : vector<16x64xf32>
    %cst_58 = arith.constant 5.000000e-01 : f32
    %140 = vector.broadcast %cst_58 : f32 to vector<16x64xf32>
    %141 = arith.mulf %140, %139 : vector<16x64xf32>
    %142 = arith.mulf %129, %141 : vector<16x64xf32>
    %c0_59 = arith.constant 0 : index
    %c0_60 = arith.constant 0 : index
    %c0_61 = arith.constant 0 : index
    %143 = vector.load %arg14[%c0_59, %c0_60, %c0_61] : memref<2x64x32xf32, #tpu.memory_space<vmem>>, vector<1x64x32xf32>
    %144 = vector.shape_cast %143 : vector<1x64x32xf32> to vector<64x32xf32>
    %cst_62 = arith.constant dense<0.000000e+00> : vector<16x32xf32>
    %145 = tpu.matmul %142, %144, %cst_62 {dimension_numbers = #tpu.dot_dimension_numbers<[1], [0], [0], [1], [0, 0, 1, 1], [], []>} : vector<16x64xf32>, vector<64x32xf32>, vector<16x32xf32> -> vector<16x32xf32>
    %c0_63 = arith.constant 0 : index
    %c0_64 = arith.constant 0 : index
    %c0_65 = arith.constant 0 : index
    %146 = vector.load %arg15[%c0_63, %c0_64, %c0_65] : memref<2x1x32xf32, #tpu.memory_space<vmem>>, vector<1x1x32xf32>
    %147 = vector.shape_cast %146 : vector<1x1x32xf32> to vector<1x32xf32>
    %148 = vector.broadcast %147 : vector<1x32xf32> to vector<16x32xf32>
    %149 = arith.addf %145, %148 : vector<16x32xf32>
    %150 = arith.addf %122, %149 : vector<16x32xf32>
    %151 = vector.extract_strided_slice %36 {offsets = [2, 0], sizes = [1, 32], strides = [1, 1]} : vector<4x32xf32> to vector<1x32xf32>
    %152 = vector.extract_strided_slice %36 {offsets = [3, 0], sizes = [1, 32], strides = [1, 1]} : vector<4x32xf32> to vector<1x32xf32>
    %cst_66 = arith.constant dense<0.000000e+00> : vector<16xf32>
    %153 = vector.multi_reduction <add>, %150, %cst_66 [1] : vector<16x32xf32> to vector<16xf32>
    %154 = vector.shape_cast %153 : vector<16xf32> to vector<16x1xf32>
    %cst_67 = arith.constant 3.200000e+01 : f32
    %155 = vector.broadcast %cst_67 : f32 to vector<16x1xf32>
    %156 = arith.divf %154, %155 : vector<16x1xf32>
    %157 = vector.broadcast %156 : vector<16x1xf32> to vector<16x32xf32>
    %158 = arith.subf %150, %157 : vector<16x32xf32>
    %159 = arith.mulf %158, %158 : vector<16x32xf32>
    %cst_68 = arith.constant dense<0.000000e+00> : vector<16xf32>
    %160 = vector.multi_reduction <add>, %159, %cst_68 [1] : vector<16x32xf32> to vector<16xf32>
    %161 = vector.shape_cast %160 : vector<16xf32> to vector<16x1xf32>
    %cst_69 = arith.constant 3.200000e+01 : f32
    %162 = vector.broadcast %cst_69 : f32 to vector<16x1xf32>
    %163 = arith.divf %161, %162 : vector<16x1xf32>
    %164 = vector.broadcast %156 : vector<16x1xf32> to vector<16x32xf32>
    %165 = arith.subf %150, %164 : vector<16x32xf32>
    %cst_70 = arith.constant 9.99999996E-13 : f32
    %166 = vector.broadcast %cst_70 : f32 to vector<16x1xf32>
    %167 = arith.addf %163, %166 : vector<16x1xf32>
    %168 = math.rsqrt %167 : vector<16x1xf32>
    %169 = vector.broadcast %168 : vector<16x1xf32> to vector<16x32xf32>
    %170 = arith.mulf %165, %169 : vector<16x32xf32>
    %171 = vector.broadcast %151 : vector<1x32xf32> to vector<16x32xf32>
    %172 = arith.mulf %170, %171 : vector<16x32xf32>
    %173 = vector.broadcast %152 : vector<1x32xf32> to vector<16x32xf32>
    %174 = arith.addf %172, %173 : vector<16x32xf32>
    %c1 = arith.constant 1 : index
    %c0_71 = arith.constant 0 : index
    %c0_72 = arith.constant 0 : index
    %175 = vector.load %arg11[%c1, %c0_71, %c0_72] : memref<2x4x32xf32, #tpu.memory_space<vmem>>, vector<1x4x32xf32>
    %176 = vector.shape_cast %175 : vector<1x4x32xf32> to vector<4x32xf32>
    %c1_73 = arith.constant 1 : index
    %c0_74 = arith.constant 0 : index
    %c0_75 = arith.constant 0 : index
    %177 = vector.load %arg7[%c1_73, %c0_74, %c0_75] : memref<2x32x96xf32, #tpu.memory_space<vmem>>, vector<1x32x96xf32>
    %178 = vector.shape_cast %177 : vector<1x32x96xf32> to vector<32x96xf32>
    %cst_76 = arith.constant dense<0.000000e+00> : vector<16x96xf32>
    %179 = tpu.matmul %174, %178, %cst_76 {dimension_numbers = #tpu.dot_dimension_numbers<[1], [0], [0], [1], [0, 0, 1, 1], [], []>} : vector<16x32xf32>, vector<32x96xf32>, vector<16x96xf32> -> vector<16x96xf32>
    %c1_77 = arith.constant 1 : index
    %c0_78 = arith.constant 0 : index
    %c0_79 = arith.constant 0 : index
    %180 = vector.load %arg8[%c1_77, %c0_78, %c0_79] : memref<2x1x96xf32, #tpu.memory_space<vmem>>, vector<1x1x96xf32>
    %181 = vector.shape_cast %180 : vector<1x1x96xf32> to vector<1x96xf32>
    %182 = vector.broadcast %181 : vector<1x96xf32> to vector<16x96xf32>
    %183 = arith.addf %179, %182 : vector<16x96xf32>
    %184 = vector.extract_strided_slice %183 {offsets = [0, 0], sizes = [16, 16], strides = [1, 1]} : vector<16x96xf32> to vector<16x16xf32>
    %185 = vector.shape_cast %184 : vector<16x16xf32> to vector<2x8x16xf32>
    %186 = vector.extract_strided_slice %183 {offsets = [0, 32], sizes = [16, 16], strides = [1, 1]} : vector<16x96xf32> to vector<16x16xf32>
    %187 = vector.shape_cast %186 : vector<16x16xf32> to vector<2x8x16xf32>
    %188 = vector.extract_strided_slice %183 {offsets = [0, 64], sizes = [16, 16], strides = [1, 1]} : vector<16x96xf32> to vector<16x16xf32>
    %189 = vector.shape_cast %188 : vector<16x16xf32> to vector<2x8x16xf32>
    "tpu.trace_start"() <{level = 10 : i32, message = "bqd,bkd->bqk"}> : () -> ()
    %cst_80 = arith.constant dense<0.000000e+00> : vector<2x8x8xf32>
    %190 = tpu.matmul %185, %187, %cst_80 {dimension_numbers = #tpu.dot_dimension_numbers<[2], [2], [1], [1], [0, 0, 0, 1, 1, 1], [0], [0]>} : vector<2x8x16xf32>, vector<2x8x16xf32>, vector<2x8x8xf32> -> vector<2x8x8xf32>
    "tpu.trace_stop"() : () -> ()
    %cst_81 = arith.constant 2.500000e-01 : f32
    %191 = vector.broadcast %cst_81 : f32 to vector<2x8x8xf32>
    %192 = arith.mulf %190, %191 : vector<2x8x8xf32>
    %193 = vector.broadcast %34 : vector<2x1x8xf32> to vector<2x8x8xf32>
    %194 = arith.addf %192, %193 : vector<2x8x8xf32>
    %cst_82 = arith.constant dense<0xFF800000> : vector<2x8xf32>
    %195 = vector.multi_reduction <maximumf>, %194, %cst_82 [2] : vector<2x8x8xf32> to vector<2x8xf32>
    %196 = vector.shape_cast %195 : vector<2x8xf32> to vector<2x8x1xf32>
    %197 = vector.broadcast %196 : vector<2x8x1xf32> to vector<2x8x8xf32>
    %198 = arith.subf %194, %197 : vector<2x8x8xf32>
    %199 = math.exp %198 : vector<2x8x8xf32>
    %cst_83 = arith.constant dense<0.000000e+00> : vector<2x8xf32>
    %200 = vector.multi_reduction <add>, %199, %cst_83 [2] : vector<2x8x8xf32> to vector<2x8xf32>
    %201 = vector.shape_cast %200 : vector<2x8xf32> to vector<2x8x1xf32>
    %202 = tpu.reciprocal %201 {approx = true} : vector<2x8x1xf32> -> vector<2x8x1xf32>
    %203 = vector.broadcast %202 : vector<2x8x1xf32> to vector<2x8x8xf32>
    %204 = arith.mulf %199, %203 : vector<2x8x8xf32>
    "tpu.trace_start"() <{level = 10 : i32, message = "bqk,bkd->bqd"}> : () -> ()
    %cst_84 = arith.constant dense<0.000000e+00> : vector<2x8x16xf32>
    %205 = tpu.matmul %204, %189, %cst_84 {dimension_numbers = #tpu.dot_dimension_numbers<[2], [1], [1], [2], [0, 0, 0, 1, 1, 2], [0], [0]>} : vector<2x8x8xf32>, vector<2x8x16xf32>, vector<2x8x16xf32> -> vector<2x8x16xf32>
    "tpu.trace_stop"() : () -> ()
    %206 = vector.shape_cast %205 : vector<2x8x16xf32> to vector<16x16xf32>
    %207 = vector.extract_strided_slice %183 {offsets = [0, 16], sizes = [16, 16], strides = [1, 1]} : vector<16x96xf32> to vector<16x16xf32>
    %208 = vector.shape_cast %207 : vector<16x16xf32> to vector<2x8x16xf32>
    %209 = vector.extract_strided_slice %183 {offsets = [0, 48], sizes = [16, 16], strides = [1, 1]} : vector<16x96xf32> to vector<16x16xf32>
    %210 = vector.shape_cast %209 : vector<16x16xf32> to vector<2x8x16xf32>
    %211 = vector.extract_strided_slice %183 {offsets = [0, 80], sizes = [16, 16], strides = [1, 1]} : vector<16x96xf32> to vector<16x16xf32>
    %212 = vector.shape_cast %211 : vector<16x16xf32> to vector<2x8x16xf32>
    "tpu.trace_start"() <{level = 10 : i32, message = "bqd,bkd->bqk"}> : () -> ()
    %cst_85 = arith.constant dense<0.000000e+00> : vector<2x8x8xf32>
    %213 = tpu.matmul %208, %210, %cst_85 {dimension_numbers = #tpu.dot_dimension_numbers<[2], [2], [1], [1], [0, 0, 0, 1, 1, 1], [0], [0]>} : vector<2x8x16xf32>, vector<2x8x16xf32>, vector<2x8x8xf32> -> vector<2x8x8xf32>
    "tpu.trace_stop"() : () -> ()
    %cst_86 = arith.constant 2.500000e-01 : f32
    %214 = vector.broadcast %cst_86 : f32 to vector<2x8x8xf32>
    %215 = arith.mulf %213, %214 : vector<2x8x8xf32>
    %216 = vector.broadcast %34 : vector<2x1x8xf32> to vector<2x8x8xf32>
    %217 = arith.addf %215, %216 : vector<2x8x8xf32>
    %cst_87 = arith.constant dense<0xFF800000> : vector<2x8xf32>
    %218 = vector.multi_reduction <maximumf>, %217, %cst_87 [2] : vector<2x8x8xf32> to vector<2x8xf32>
    %219 = vector.shape_cast %218 : vector<2x8xf32> to vector<2x8x1xf32>
    %220 = vector.broadcast %219 : vector<2x8x1xf32> to vector<2x8x8xf32>
    %221 = arith.subf %217, %220 : vector<2x8x8xf32>
    %222 = math.exp %221 : vector<2x8x8xf32>
    %cst_88 = arith.constant dense<0.000000e+00> : vector<2x8xf32>
    %223 = vector.multi_reduction <add>, %222, %cst_88 [2] : vector<2x8x8xf32> to vector<2x8xf32>
    %224 = vector.shape_cast %223 : vector<2x8xf32> to vector<2x8x1xf32>
    %225 = tpu.reciprocal %224 {approx = true} : vector<2x8x1xf32> -> vector<2x8x1xf32>
    %226 = vector.broadcast %225 : vector<2x8x1xf32> to vector<2x8x8xf32>
    %227 = arith.mulf %222, %226 : vector<2x8x8xf32>
    "tpu.trace_start"() <{level = 10 : i32, message = "bqk,bkd->bqd"}> : () -> ()
    %cst_89 = arith.constant dense<0.000000e+00> : vector<2x8x16xf32>
    %228 = tpu.matmul %227, %212, %cst_89 {dimension_numbers = #tpu.dot_dimension_numbers<[2], [1], [1], [2], [0, 0, 0, 1, 1, 2], [0], [0]>} : vector<2x8x8xf32>, vector<2x8x16xf32>, vector<2x8x16xf32> -> vector<2x8x16xf32>
    "tpu.trace_stop"() : () -> ()
    %229 = vector.shape_cast %228 : vector<2x8x16xf32> to vector<16x16xf32>
    %230 = tpu.concatenate %206, %229 in 1 : vector<16x16xf32>, vector<16x16xf32> -> vector<16x32xf32>
    %c1_90 = arith.constant 1 : index
    %c0_91 = arith.constant 0 : index
    %c0_92 = arith.constant 0 : index
    %231 = vector.load %arg9[%c1_90, %c0_91, %c0_92] : memref<2x32x32xf32, #tpu.memory_space<vmem>>, vector<1x32x32xf32>
    %232 = vector.shape_cast %231 : vector<1x32x32xf32> to vector<32x32xf32>
    %cst_93 = arith.constant dense<0.000000e+00> : vector<16x32xf32>
    %233 = tpu.matmul %230, %232, %cst_93 {dimension_numbers = #tpu.dot_dimension_numbers<[1], [0], [0], [1], [0, 0, 1, 1], [], []>} : vector<16x32xf32>, vector<32x32xf32>, vector<16x32xf32> -> vector<16x32xf32>
    %c1_94 = arith.constant 1 : index
    %c0_95 = arith.constant 0 : index
    %c0_96 = arith.constant 0 : index
    %234 = vector.load %arg10[%c1_94, %c0_95, %c0_96] : memref<2x1x32xf32, #tpu.memory_space<vmem>>, vector<1x1x32xf32>
    %235 = vector.shape_cast %234 : vector<1x1x32xf32> to vector<1x32xf32>
    %236 = vector.broadcast %235 : vector<1x32xf32> to vector<16x32xf32>
    %237 = arith.addf %233, %236 : vector<16x32xf32>
    %238 = arith.addf %174, %237 : vector<16x32xf32>
    %239 = vector.extract_strided_slice %176 {offsets = [0, 0], sizes = [1, 32], strides = [1, 1]} : vector<4x32xf32> to vector<1x32xf32>
    %240 = vector.extract_strided_slice %176 {offsets = [1, 0], sizes = [1, 32], strides = [1, 1]} : vector<4x32xf32> to vector<1x32xf32>
    %cst_97 = arith.constant dense<0.000000e+00> : vector<16xf32>
    %241 = vector.multi_reduction <add>, %238, %cst_97 [1] : vector<16x32xf32> to vector<16xf32>
    %242 = vector.shape_cast %241 : vector<16xf32> to vector<16x1xf32>
    %cst_98 = arith.constant 3.200000e+01 : f32
    %243 = vector.broadcast %cst_98 : f32 to vector<16x1xf32>
    %244 = arith.divf %242, %243 : vector<16x1xf32>
    %245 = vector.broadcast %244 : vector<16x1xf32> to vector<16x32xf32>
    %246 = arith.subf %238, %245 : vector<16x32xf32>
    %247 = arith.mulf %246, %246 : vector<16x32xf32>
    %cst_99 = arith.constant dense<0.000000e+00> : vector<16xf32>
    %248 = vector.multi_reduction <add>, %247, %cst_99 [1] : vector<16x32xf32> to vector<16xf32>
    %249 = vector.shape_cast %248 : vector<16xf32> to vector<16x1xf32>
    %cst_100 = arith.constant 3.200000e+01 : f32
    %250 = vector.broadcast %cst_100 : f32 to vector<16x1xf32>
    %251 = arith.divf %249, %250 : vector<16x1xf32>
    %252 = vector.broadcast %244 : vector<16x1xf32> to vector<16x32xf32>
    %253 = arith.subf %238, %252 : vector<16x32xf32>
    %cst_101 = arith.constant 9.99999996E-13 : f32
    %254 = vector.broadcast %cst_101 : f32 to vector<16x1xf32>
    %255 = arith.addf %251, %254 : vector<16x1xf32>
    %256 = math.rsqrt %255 : vector<16x1xf32>
    %257 = vector.broadcast %256 : vector<16x1xf32> to vector<16x32xf32>
    %258 = arith.mulf %253, %257 : vector<16x32xf32>
    %259 = vector.broadcast %239 : vector<1x32xf32> to vector<16x32xf32>
    %260 = arith.mulf %258, %259 : vector<16x32xf32>
    %261 = vector.broadcast %240 : vector<1x32xf32> to vector<16x32xf32>
    %262 = arith.addf %260, %261 : vector<16x32xf32>
    %c1_102 = arith.constant 1 : index
    %c0_103 = arith.constant 0 : index
    %c0_104 = arith.constant 0 : index
    %263 = vector.load %arg12[%c1_102, %c0_103, %c0_104] : memref<2x32x64xf32, #tpu.memory_space<vmem>>, vector<1x32x64xf32>
    %264 = vector.shape_cast %263 : vector<1x32x64xf32> to vector<32x64xf32>
    %cst_105 = arith.constant dense<0.000000e+00> : vector<16x64xf32>
    %265 = tpu.matmul %262, %264, %cst_105 {dimension_numbers = #tpu.dot_dimension_numbers<[1], [0], [0], [1], [0, 0, 1, 1], [], []>} : vector<16x32xf32>, vector<32x64xf32>, vector<16x64xf32> -> vector<16x64xf32>
    %c1_106 = arith.constant 1 : index
    %c0_107 = arith.constant 0 : index
    %c0_108 = arith.constant 0 : index
    %266 = vector.load %arg13[%c1_106, %c0_107, %c0_108] : memref<2x1x64xf32, #tpu.memory_space<vmem>>, vector<1x1x64xf32>
    %267 = vector.shape_cast %266 : vector<1x1x64xf32> to vector<1x64xf32>
    %268 = vector.broadcast %267 : vector<1x64xf32> to vector<16x64xf32>
    %269 = arith.addf %265, %268 : vector<16x64xf32>
    %270 = arith.mulf %269, %269 : vector<16x64xf32>
    %271 = arith.mulf %269, %270 : vector<16x64xf32>
    %cst_109 = arith.constant 4.471500e-02 : f32
    %272 = vector.broadcast %cst_109 : f32 to vector<16x64xf32>
    %273 = arith.mulf %272, %271 : vector<16x64xf32>
    %274 = arith.addf %269, %273 : vector<16x64xf32>
    %cst_110 = arith.constant 0.797884583 : f32
    %275 = vector.broadcast %cst_110 : f32 to vector<16x64xf32>
    %276 = arith.mulf %275, %274 : vector<16x64xf32>
    %277 = math.tanh %276 : vector<16x64xf32>
    %cst_111 = arith.constant 1.000000e+00 : f32
    %278 = vector.broadcast %cst_111 : f32 to vector<16x64xf32>
    %279 = arith.addf %278, %277 : vector<16x64xf32>
    %cst_112 = arith.constant 5.000000e-01 : f32
    %280 = vector.broadcast %cst_112 : f32 to vector<16x64xf32>
    %281 = arith.mulf %280, %279 : vector<16x64xf32>
    %282 = arith.mulf %269, %281 : vector<16x64xf32>
    %c1_113 = arith.constant 1 : index
    %c0_114 = arith.constant 0 : index
    %c0_115 = arith.constant 0 : index
    %283 = vector.load %arg14[%c1_113, %c0_114, %c0_115] : memref<2x64x32xf32, #tpu.memory_space<vmem>>, vector<1x64x32xf32>
    %284 = vector.shape_cast %283 : vector<1x64x32xf32> to vector<64x32xf32>
    %cst_116 = arith.constant dense<0.000000e+00> : vector<16x32xf32>
    %285 = tpu.matmul %282, %284, %cst_116 {dimension_numbers = #tpu.dot_dimension_numbers<[1], [0], [0], [1], [0, 0, 1, 1], [], []>} : vector<16x64xf32>, vector<64x32xf32>, vector<16x32xf32> -> vector<16x32xf32>
    %c1_117 = arith.constant 1 : index
    %c0_118 = arith.constant 0 : index
    %c0_119 = arith.constant 0 : index
    %286 = vector.load %arg15[%c1_117, %c0_118, %c0_119] : memref<2x1x32xf32, #tpu.memory_space<vmem>>, vector<1x1x32xf32>
    %287 = vector.shape_cast %286 : vector<1x1x32xf32> to vector<1x32xf32>
    %288 = vector.broadcast %287 : vector<1x32xf32> to vector<16x32xf32>
    %289 = arith.addf %285, %288 : vector<16x32xf32>
    %290 = arith.addf %262, %289 : vector<16x32xf32>
    %291 = vector.extract_strided_slice %176 {offsets = [2, 0], sizes = [1, 32], strides = [1, 1]} : vector<4x32xf32> to vector<1x32xf32>
    %292 = vector.extract_strided_slice %176 {offsets = [3, 0], sizes = [1, 32], strides = [1, 1]} : vector<4x32xf32> to vector<1x32xf32>
    %cst_120 = arith.constant dense<0.000000e+00> : vector<16xf32>
    %293 = vector.multi_reduction <add>, %290, %cst_120 [1] : vector<16x32xf32> to vector<16xf32>
    %294 = vector.shape_cast %293 : vector<16xf32> to vector<16x1xf32>
    %cst_121 = arith.constant 3.200000e+01 : f32
    %295 = vector.broadcast %cst_121 : f32 to vector<16x1xf32>
    %296 = arith.divf %294, %295 : vector<16x1xf32>
    %297 = vector.broadcast %296 : vector<16x1xf32> to vector<16x32xf32>
    %298 = arith.subf %290, %297 : vector<16x32xf32>
    %299 = arith.mulf %298, %298 : vector<16x32xf32>
    %cst_122 = arith.constant dense<0.000000e+00> : vector<16xf32>
    %300 = vector.multi_reduction <add>, %299, %cst_122 [1] : vector<16x32xf32> to vector<16xf32>
    %301 = vector.shape_cast %300 : vector<16xf32> to vector<16x1xf32>
    %cst_123 = arith.constant 3.200000e+01 : f32
    %302 = vector.broadcast %cst_123 : f32 to vector<16x1xf32>
    %303 = arith.divf %301, %302 : vector<16x1xf32>
    %304 = vector.broadcast %296 : vector<16x1xf32> to vector<16x32xf32>
    %305 = arith.subf %290, %304 : vector<16x32xf32>
    %cst_124 = arith.constant 9.99999996E-13 : f32
    %306 = vector.broadcast %cst_124 : f32 to vector<16x1xf32>
    %307 = arith.addf %303, %306 : vector<16x1xf32>
    %308 = math.rsqrt %307 : vector<16x1xf32>
    %309 = vector.broadcast %308 : vector<16x1xf32> to vector<16x32xf32>
    %310 = arith.mulf %305, %309 : vector<16x32xf32>
    %311 = vector.broadcast %291 : vector<1x32xf32> to vector<16x32xf32>
    %312 = arith.mulf %310, %311 : vector<16x32xf32>
    %313 = vector.broadcast %292 : vector<1x32xf32> to vector<16x32xf32>
    %314 = arith.addf %312, %313 : vector<16x32xf32>
    %c0_125 = arith.constant 0 : index
    %c0_126 = arith.constant 0 : index
    %315 = vector.load %arg16[%c0_125, %c0_126] : memref<32x128xf32, #tpu.memory_space<vmem>>, vector<32x128xf32>
    %cst_127 = arith.constant dense<0.000000e+00> : vector<16x128xf32>
    %316 = tpu.matmul %314, %315, %cst_127 {dimension_numbers = #tpu.dot_dimension_numbers<[1], [0], [0], [1], [0, 0, 1, 1], [], []>} : vector<16x32xf32>, vector<32x128xf32>, vector<16x128xf32> -> vector<16x128xf32>
    %c0_128 = arith.constant 0 : index
    %c0_129 = arith.constant 0 : index
    %317 = vector.load %arg17[%c0_128, %c0_129] : memref<1x128xf32, #tpu.memory_space<vmem>>, vector<1x128xf32>
    %318 = vector.broadcast %317 : vector<1x128xf32> to vector<16x128xf32>
    %319 = arith.addf %316, %318 : vector<16x128xf32>
    %c0_130 = arith.constant 0 : index
    %c0_131 = arith.constant 0 : index
    %320 = vector.load %arg18[%c0_130, %c0_131] : memref<16x128xf32, #tpu.memory_space<vmem>>, vector<16x128xf32>
    tpu.vector_store %arg18[%c0_130, %c0_131], %319 {strides = array<i32>} : memref<16x128xf32, #tpu.memory_space<vmem>>, vector<16x128xf32>,
    %cst_132 = arith.constant dense<0xFF800000> : vector<16xf32>
    %321 = vector.multi_reduction <maximumf>, %319, %cst_132 [1] : vector<16x128xf32> to vector<16xf32>
    %322 = vector.shape_cast %321 : vector<16xf32> to vector<16x1xf32>
    %323 = vector.broadcast %322 : vector<16x1xf32> to vector<16x128xf32>
    %324 = arith.subf %319, %323 : vector<16x128xf32>
    %325 = math.exp %324 : vector<16x128xf32>
    %cst_133 = arith.constant dense<0.000000e+00> : vector<16xf32>
    %326 = vector.multi_reduction <add>, %325, %cst_133 [1] : vector<16x128xf32> to vector<16xf32>
    %327 = vector.shape_cast %326 : vector<16xf32> to vector<16x1xf32>
    %328 = math.log %327 : vector<16x1xf32>
    %329 = arith.addf %322, %328 : vector<16x1xf32>
    %c0_134 = arith.constant 0 : index
    %c0_135 = arith.constant 0 : index
    %330 = vector.load %arg6[%c0_134, %c0_135] : memref<16x1xi32, #tpu.memory_space<vmem>>, vector<16x1xi32>
    %331 = tpu.iota {dimensions = array<i32: 1>} : vector<16x128xi32>
    %332 = vector.broadcast %330 : vector<16x1xi32> to vector<16x128xi32>
    %333 = arith.cmpi eq, %331, %332 : vector<16x128xi32>
    %cst_136 = arith.constant 0.000000e+00 : f32
    %334 = vector.broadcast %cst_136 : f32 to vector<16x128xf32>
    %335 = arith.select %333, %319, %334 : vector<16x128xi1>, vector<16x128xf32>
    %cst_137 = arith.constant dense<0.000000e+00> : vector<16xf32>
    %336 = vector.multi_reduction <add>, %335, %cst_137 [1] : vector<16x128xf32> to vector<16xf32>
    %337 = vector.shape_cast %336 : vector<16xf32> to vector<16x1xf32>
    %c0_138 = arith.constant 0 : index
    %c0_139 = arith.constant 0 : index
    %338 = vector.load %arg5[%c0_138, %c0_139] : memref<16x1xf32, #tpu.memory_space<vmem>>, vector<16x1xf32>
    %339 = arith.subf %329, %337 : vector<16x1xf32>
    %340 = arith.mulf %339, %338 : vector<16x1xf32>
    %341 = vector.shape_cast %340 : vector<16x1xf32> to vector<1x16x1xf32>
    %cst_140 = arith.constant dense<0.000000e+00> : vector<1xf32>
    %342 = vector.multi_reduction <add>, %341, %cst_140 [1, 2] : vector<1x16x1xf32> to vector<1xf32>
    %343 = vector.shape_cast %342 : vector<1xf32> to vector<1x1x1xf32>
    %344 = vector.extract %343[0, 0, 0] : f32 from vector<1x1x1xf32>
    %345 = vector.broadcast %344 : f32 to vector<1x1xf32>
    %346 = vector.shape_cast %338 : vector<16x1xf32> to vector<1x16x1xf32>
    %cst_141 = arith.constant dense<0.000000e+00> : vector<1xf32>
    %347 = vector.multi_reduction <add>, %346, %cst_141 [1, 2] : vector<1x16x1xf32> to vector<1xf32>
    %348 = vector.shape_cast %347 : vector<1xf32> to vector<1x1x1xf32>
    %349 = vector.extract %348[0, 0, 0] : f32 from vector<1x1x1xf32>
    %350 = vector.broadcast %349 : f32 to vector<1x1xf32>
    %351 = arith.divf %345, %350 : vector<1x1xf32>
    %c0_142 = arith.constant 0 : index
    %c0_143 = arith.constant 0 : index
    %352 = vector.load %arg19[%c0_142, %c0_143] : memref<1x1xf32, #tpu.memory_space<vmem>>, vector<1x1xf32>
    tpu.vector_store %arg19[%c0_142, %c0_143], %351 {strides = array<i32>} : memref<1x1xf32, #tpu.memory_space<vmem>>, vector<1x1xf32>,
    return
  }
}

</mosaic_0001>

<llo_original>
// kernel: _lambda_.1
$region0: #{_lambda_.1}
  #allocation0 [shape = 'u32[]', space=smem, size = 0x4, offset = 0x4, fixed_abs, tag = 'smem constant byte address 0x4 - core index']
  #allocation1 [shape = 'u32[72,128]{1,0:T(1,128)}', space=vmem, size = 0x9000, scoped, tag = 'internal scratch']
  %s0 = inlined_call_operand.vmem [shape: f32[16,32], index: 0, kind: input, shape index: {}]
  %s1 = inlined_call_operand.vmem [shape: f32[16,32], index: 1, kind: input, shape index: {}]
  %s2 = inlined_call_operand.vmem [shape: f32[16,32], index: 2, kind: input, shape index: {}]
  %s3 = inlined_call_operand.vmem [shape: f32[2,32], index: 3, kind: input, shape index: {}]
  %s4 = inlined_call_operand.vmem [shape: f32[2,1,8], index: 4, kind: input, shape index: {}]
  %s5 = inlined_call_operand.vmem [shape: f32[16,1], index: 5, kind: input, shape index: {}]
  %s6 = inlined_call_operand.vmem [shape: s32[16,1], index: 6, kind: input, shape index: {}]
  %s7 = inlined_call_operand.vmem [shape: f32[2,32,96], index: 7, kind: input, shape index: {}]
  %s8 = inlined_call_operand.vmem [shape: f32[2,1,96], index: 8, kind: input, shape index: {}]
  %s9 = inlined_call_operand.vmem [shape: f32[2,32,32], index: 9, kind: input, shape index: {}]
  %s10 = inlined_call_operand.vmem [shape: f32[2,1,32], index: 10, kind: input, shape index: {}, may-alias: {10,15}]
  %s11 = inlined_call_operand.vmem [shape: f32[2,4,32], index: 11, kind: input, shape index: {}]
  %s12 = inlined_call_operand.vmem [shape: f32[2,32,64], index: 12, kind: input, shape index: {}]
  %s13 = inlined_call_operand.vmem [shape: f32[2,1,64], index: 13, kind: input, shape index: {}]
  %s14 = inlined_call_operand.vmem [shape: f32[2,64,32], index: 14, kind: input, shape index: {}]
  %s15 = inlined_call_operand.vmem [shape: f32[2,1,32], index: 15, kind: input, shape index: {}, may-alias: {10,15}]
  %s16 = inlined_call_operand.vmem [shape: f32[32,128], index: 16, kind: input, shape index: {}]
  %s17 = inlined_call_operand.vmem [shape: f32[1,128], index: 17, kind: input, shape index: {}]
  %s18 = inlined_call_operand.vmem [shape: f32[16,128], index: 18, kind: output, shape index: {0}]
  %s19 = inlined_call_operand.hbm [shape: f32[1,1], index: 19, kind: output, shape index: {1}]
  %20 = xla_tuple %s18, %s19
  %s21 = sld [smem:[#allocation0]]
  $region90: #{_lambda_.1} parent=0
    _
  %s23 = ssub.s32 1, %s21
  %s24 = scalar_select 0, %s23, %s21
  $region1: #{_lambda_.1} parent=0
    #allocation2 [shape = 'u8[512]{0}', space=vmem, size = 0x400, scoped, tag = 'output window, operand 1, single buffered']
    #allocation3 [shape = 's32[1]{0}', space=sflag, size = 0x4, scoped, tag = 'scoped memory for _lambda_.1']
    %25 = vsyncpa [#allocation3], 0
    // Predicated region
    $region2: #{_lambda_.1} parent=1 // pred_check
      _
    $region3: #{_lambda_.1} parent=1 // pred_check_branch
      %27 = sbr.rel (0) target = $region5
    $region4: #{_lambda_.1} parent=1 // pred_region
      _
    $region5: #{_lambda_.1} parent=1 // pred_fallthru
      _
    // Predicated region
    $region6: #{_lambda_.1} parent=1 // pred_check
      _
    $region7: #{_lambda_.1} parent=1 // pred_check_branch
      %29 = sbr.rel (0) target = $region9
    $region8: #{_lambda_.1} parent=1 // pred_region
      _
    $region9: #{_lambda_.1} parent=1 // pred_fallthru
      _
    // Predicated region
    $region10: #{_lambda_.1} parent=1 // pred_check
      _
    $region11: #{_lambda_.1} parent=1 // pred_check_branch
      %31 = sbr.rel (0) target = $region13
    $region12: #{_lambda_.1} parent=1 // pred_region
      _
    $region13: #{_lambda_.1} parent=1 // pred_fallthru
      _
    // Predicated region
    $region14: #{_lambda_.1} parent=1 // pred_check
      _
    $region15: #{_lambda_.1} parent=1 // pred_check_branch
      %33 = sbr.rel (0) target = $region17
    $region16: #{_lambda_.1} parent=1 // pred_region
      _
    $region17: #{_lambda_.1} parent=1 // pred_fallthru
      _
    // Predicated region
    $region18: #{_lambda_.1} parent=1 // pred_check
      _
    $region19: #{_lambda_.1} parent=1 // pred_check_branch
      %35 = sbr.rel (0) target = $region21
    $region20: #{_lambda_.1} parent=1 // pred_region
      _
    $region21: #{_lambda_.1} parent=1 // pred_fallthru
      _
    // Predicated region
    $region22: #{_lambda_.1} parent=1 // pred_check
      _
    $region23: #{_lambda_.1} parent=1 // pred_check_branch
      %37 = sbr.rel (0) target = $region25
    $region24: #{_lambda_.1} parent=1 // pred_region
      _
    $region25: #{_lambda_.1} parent=1 // pred_fallthru
      _
    // Predicated region
    $region26: #{_lambda_.1} parent=1 // pred_check
      _
    $region27: #{_lambda_.1} parent=1 // pred_check_branch
      %39 = sbr.rel (0) target = $region29
    $region28: #{_lambda_.1} parent=1 // pred_region
      _
    $region29: #{_lambda_.1} parent=1 // pred_fallthru
      _
    // Predicated region
    $region30: #{_lambda_.1} parent=1 // pred_check
      _
    $region31: #{_lambda_.1} parent=1 // pred_check_branch
      %41 = sbr.rel (0) target = $region33
    $region32: #{_lambda_.1} parent=1 // pred_region
      _
    $region33: #{_lambda_.1} parent=1 // pred_fallthru
      _
    // Predicated region
    $region34: #{_lambda_.1} parent=1 // pred_check
      _
    $region35: #{_lambda_.1} parent=1 // pred_check_branch
      %43 = sbr.rel (0) target = $region37
    $region36: #{_lambda_.1} parent=1 // pred_region
      _
    $region37: #{_lambda_.1} parent=1 // pred_fallthru
      _
    // Predicated region
    $region38: #{_lambda_.1} parent=1 // pred_check
      _
    $region39: #{_lambda_.1} parent=1 // pred_check_branch
      %45 = sbr.rel (0) target = $region41
    $region40: #{_lambda_.1} parent=1 // pred_region
      _
    $region41: #{_lambda_.1} parent=1 // pred_fallthru
      _
    // Predicated region
    $region42: #{_lambda_.1} parent=1 // pred_check
      _
    $region43: #{_lambda_.1} parent=1 // pred_check_branch
      %47 = sbr.rel (0) target = $region45
    $region44: #{_lambda_.1} parent=1 // pred_region
      _
    $region45: #{_lambda_.1} parent=1 // pred_fallthru
      _
    // Predicated region
    $region46: #{_lambda_.1} parent=1 // pred_check
      _
    $region47: #{_lambda_.1} parent=1 // pred_check_branch
      %49 = sbr.rel (0) target = $region49
    $region48: #{_lambda_.1} parent=1 // pred_region
      _
    $region49: #{_lambda_.1} parent=1 // pred_fallthru
      _
    // Predicated region
    $region50: #{_lambda_.1} parent=1 // pred_check
      _
    $region51: #{_lambda_.1} parent=1 // pred_check_branch
      %51 = sbr.rel (0) target = $region53
    $region52: #{_lambda_.1} parent=1 // pred_region
      _
    $region53: #{_lambda_.1} parent=1 // pred_fallthru
      _
    // Predicated region
    $region54: #{_lambda_.1} parent=1 // pred_check
      _
    $region55: #{_lambda_.1} parent=1 // pred_check_branch
      %53 = sbr.rel (0) target = $region57
    $region56: #{_lambda_.1} parent=1 // pred_region
      _
    $region57: #{_lambda_.1} parent=1 // pred_fallthru
      _
    // Predicated region
    $region58: #{_lambda_.1} parent=1 // pred_check
      _
    $region59: #{_lambda_.1} parent=1 // pred_check_branch
      %55 = sbr.rel (0) target = $region61
    $region60: #{_lambda_.1} parent=1 // pred_region
      _
    $region61: #{_lambda_.1} parent=1 // pred_fallthru
      _
    // Predicated region
    $region62: #{_lambda_.1} parent=1 // pred_check
      _
    $region63: #{_lambda_.1} parent=1 // pred_check_branch
      %57 = sbr.rel (0) target = $region65
    $region64: #{_lambda_.1} parent=1 // pred_region
      _
    $region65: #{_lambda_.1} parent=1 // pred_fallthru
      _
    // Predicated region
    $region66: #{_lambda_.1} parent=1 // pred_check
      _
    $region67: #{_lambda_.1} parent=1 // pred_check_branch
      %59 = sbr.rel (0) target = $region69
    $region68: #{_lambda_.1} parent=1 // pred_region
      _
    $region69: #{_lambda_.1} parent=1 // pred_fallthru
      _
    // Predicated region
    $region70: #{_lambda_.1} parent=1 // pred_check
      _
    $region71: #{_lambda_.1} parent=1 // pred_check_branch
      %61 = sbr.rel (0) target = $region73
    $region72: #{_lambda_.1} parent=1 // pred_region
      _
    $region73: #{_lambda_.1} parent=1 // pred_fallthru
      _
    %v62 = vld [vmem:[%s3] sm:$0x3]
    %v63 = vld [vmem:[%s0] sm:$0xff]
    %v64 = vld [vmem:[%s0 + $0x8] sm:$0xff]
    %v65 = vld [vmem:[%s1] sm:$0xff]
    %v66 = vld [vmem:[%s1 + $0x8] sm:$0xff]
    %v67 = vadd.f32 %v63, %v65
    %v68 = vadd.f32 %v64, %v66
    %v69 = vld [vmem:[%s2] sm:$0xff]
    %v70 = vld [vmem:[%s2 + $0x8] sm:$0xff]
    %v71 = vadd.f32 %v67, %v69
    %v72 = vadd.f32 %v68, %v70
    %vm73 = vcmask 261120
    %v74 = vsel %vm73, %v71, 0.0
    %75 = vadd.xlane.f32.xlu0 %v74
    %v76 = vpop.xlane.xlu0 %75
    %v77 = vsel %vm73, %v72, 0.0
    %78 = vadd.xlane.f32.xlu0 %v77
    %v79 = vpop.xlane.xlu0 %78
    %v80 = vrcp.pop 32.0
    %v81 = vmul.f32 32.0, %v80
    %v82 = vsub.f32 1.0, %v81
    %v83 = vmul.f32 %v80, %v82
    %v84 = vadd.f32 %v80, %v83
    %vm85 = vweird.f32 %v80
    %v86 = vsel %vm85, %v80, %v84
    %v87 = vmul.f32 %v76, %v86
    %v88 = vmul.f32 %v79, %v86
    %v89 = vsub.f32 %v71, %v87
    %v90 = vsub.f32 %v72, %v88
    %v91 = vmul.f32 %v89, %v89
    %v92 = vmul.f32 %v90, %v90
    %v93 = vsel %vm73, %v91, 0.0
    %94 = vadd.xlane.f32.xlu0 %v93
    %v95 = vpop.xlane.xlu0 %94
    %v96 = vsel %vm73, %v92, 0.0
    %97 = vadd.xlane.f32.xlu0 %v96
    %v98 = vpop.xlane.xlu0 %97
    %v99 = vmul.f32 %v95, %v86
    %v100 = vmul.f32 %v98, %v86
    %v101 = vadd.f32 %v99, 1e-12
    %v102 = vadd.f32 %v100, 1e-12
    %v103 = vrsqrt.pop %v101
    %v104 = vmul.f32 %v103, %v101
    %v105 = vmul.f32 %v104, %v103
    %v106 = vmul.f32 0.5, %v105
    %v107 = vsub.f32 1.5, %v106
    %v108 = vmul.f32 %v103, %v107
    %vm109 = vweird.f32 %v101
    %vm110 = vweird.f32 %v103
    %vm111 = vmor %vm109, %vm110
    %v112 = vsel %vm111, %v103, %v108
    %v113 = vrsqrt.pop %v102
    %v114 = vmul.f32 %v113, %v102
    %v115 = vmul.f32 %v114, %v113
    %v116 = vmul.f32 0.5, %v115
    %v117 = vsub.f32 1.5, %v116
    %v118 = vmul.f32 %v113, %v117
    %vm119 = vweird.f32 %v102
    %vm120 = vweird.f32 %v113
    %vm121 = vmor %vm119, %vm120
    %v122 = vsel %vm121, %v113, %v118
    %v123 = vmul.f32 %v89, %v112
    %v124 = vmul.f32 %v90, %v122
    %v125 = vperm.slane %v62, 0
    %v126 = vmul.f32 %v123, %v125
    %v127 = vmul.f32 %v124, %v125
    %v128 = vperm.slane %v62, 1
    %v129 = vadd.f32 %v126, %v128
    %v130 = vadd.f32 %v127, %v128
    %v131 = vld [vmem:[%s4] sm:$0x1]
    %v132 = vld [vmem:[%s4 + $0x1] sm:$0x1]
    %v133 = vsub.f32 1.0, %v131
    %v134 = vsub.f32 1.0, %v132
    %v135 = vmul.f32 %v133, -1e+09
    %v136 = vmul.f32 %v134, -1e+09
    %v137 = vld [vmem:[%s11] sm:$0xf]
    %v138 = vld [vmem:[%s7] sm:$0xff]
    %v139 = vld [vmem:[%s7 + $0x8] sm:$0xff]
    %v140 = vld [vmem:[%s7 + $0x10] sm:$0xff]
    %v141 = vld [vmem:[%s7 + $0x18] sm:$0xff]
    %v142 = vld [vmem:[%s8] sm:$0x1]
    %v144 = vperm.slane %v142, 0
    %v147 = vsel %vm73, %v129, 0
    %v150 = vsel %vm73, %v130, 0
    %152 = vmatpush.msra.mxu0 0.0
    %153 = vmatpush.msra.mxu0 0.0
    %154 = vmatpush.msra.mxu0 0.0
    %155 = vmatpush.msra.mxu0 0.0
    %156 = vmatpush.msra.mxu0 0.0
    %157 = vmatpush.msra.mxu0 0.0
    %158 = vmatpush.msra.mxu0 0.0
    %159 = vmatpush.msra.mxu0 0.0
    %160 = vmatpush.msra.mxu0 0.0
    %161 = vmatpush.msra.mxu0 0.0
    %162 = vmatpush.msra.mxu0 0.0
    %163 = vmatpush.msra.mxu0 0.0
    %164 = vmatpush.msra.mxu0 %v141
    %165 = vmatpush.msra.mxu0 %v140
    %166 = vmatpush.msra.mxu0 %v139
    %167 = vmatpush.msra.mxu0 %v138
    %168 = vmatmul.f32.gmra.mxu0 %v147
    %v169 = vpop.f32.mrf.mxu0
    %v170 = vadd.f32 %v144, %v169
    %171 = vmatmul.f32.gmra.mxu0 %v150
    %v172 = vpop.f32.mrf.mxu0
    %v173 = vadd.f32 %v144, %v172
    %174 = vdwg.mxu0
    %176 = vrot.lane.b32.xlu0 %v170, 96
    %v177 = vpop.permute.xlu0 %176
    %vm178 = vcmask 130048
    %v179 = vsel %vm178, %v170, 0
    %v181 = vsel %vm178, %v177, 0
    %183 = vmatpush.xpose.msra.mxu0 0.0
    %184 = vmatpush.xpose.msra.mxu0 0.0
    %185 = vmatpush.xpose.msra.mxu0 0.0
    %186 = vmatpush.xpose.msra.mxu0 0.0
    %187 = vmatpush.xpose.msra.mxu0 0.0
    %188 = vmatpush.xpose.msra.mxu0 0.0
    %189 = vmatpush.xpose.msra.mxu0 0.0
    %190 = vmatpush.xpose.msra.mxu0 0.0
    %191 = vmatpush.xpose.msra.mxu0 0.0
    %192 = vmatpush.xpose.msra.mxu0 0.0
    %193 = vmatpush.xpose.msra.mxu0 0.0
    %194 = vmatpush.xpose.msra.mxu0 0.0
    %195 = vmatpush.xpose.msra.mxu0 0.0
    %196 = vmatpush.xpose.msra.mxu0 0.0
    %197 = vmatpush.xpose.msra.mxu0 0.0
    %198 = vmatpush.xpose.msra.mxu0 %v181
    %199 = vmatmul.f32.gmra.mxu0 %v179
    %v200 = vpop.f32.mrf.mxu0
    %v201 = vadd.f32 0.0, %v200
    %202 = vdwg.mxu0
    %204 = vrot.lane.b32.xlu0 %v173, 96
    %v205 = vpop.permute.xlu0 %204
    %v206 = vsel %vm178, %v173, 0
    %v208 = vsel %vm178, %v205, 0
    %210 = vmatpush.xpose.msra.mxu0 0.0
    %211 = vmatpush.xpose.msra.mxu0 0.0
    %212 = vmatpush.xpose.msra.mxu0 0.0
    %213 = vmatpush.xpose.msra.mxu0 0.0
    %214 = vmatpush.xpose.msra.mxu0 0.0
    %215 = vmatpush.xpose.msra.mxu0 0.0
    %216 = vmatpush.xpose.msra.mxu0 0.0
    %217 = vmatpush.xpose.msra.mxu0 0.0
    %218 = vmatpush.xpose.msra.mxu0 0.0
    %219 = vmatpush.xpose.msra.mxu0 0.0
    %220 = vmatpush.xpose.msra.mxu0 0.0
    %221 = vmatpush.xpose.msra.mxu0 0.0
    %222 = vmatpush.xpose.msra.mxu0 0.0
    %223 = vmatpush.xpose.msra.mxu0 0.0
    %224 = vmatpush.xpose.msra.mxu0 0.0
    %225 = vmatpush.xpose.msra.mxu0 %v208
    %226 = vmatmul.f32.gmra.mxu0 %v206
    %v227 = vpop.f32.mrf.mxu0
    %v228 = vadd.f32 0.0, %v227
    %229 = vdwg.mxu0
    %v230 = vmul.f32 %v201, 0.25
    %v231 = vmul.f32 %v228, 0.25
    %v234 = vperm.slane %v135, 0
    %v235 = vperm.slane %v136, 0
    %v238 = vadd.f32 %v230, %v234
    %v239 = vadd.f32 %v231, %v235
    %vm240 = vcmask 64512
    %v241 = vsel %vm240, %v238, -inf
    %242 = vmax.xlane.f32.xlu0 %v241
    %v243 = vpop.xlane.xlu0 %242
    %v244 = vsel %vm240, %v239, -inf
    %245 = vmax.xlane.f32.xlu0 %v244
    %v246 = vpop.xlane.xlu0 %245
    %v247 = vsub.f32 %v238, %v243
    %v248 = vsub.f32 %v239, %v246
    %v249 = vmul.f32 %v247, 1.442695
    %v250 = vpow.pop %v249
    %v251 = vmul.f32 %v248, 1.442695
    %v252 = vpow.pop %v251
    %v253 = vsel %vm240, %v250, 0.0
    %254 = vadd.xlane.f32.xlu0 %v253
    %v255 = vpop.xlane.xlu0 %254
    %v256 = vsel %vm240, %v252, 0.0
    %257 = vadd.xlane.f32.xlu0 %v256
    %v258 = vpop.xlane.xlu0 %257
    %v259 = vrcp.pop %v255
    %v260 = vrcp.pop %v258
    %v261 = vmul.f32 %v250, %v259
    %v262 = vmul.f32 %v252, %v260
    %263 = vrot.lane.b32.xlu0 %v170, 64
    %v264 = vpop.permute.xlu0 %263
    %v267 = vsel %vm240, %v261, 0
    %269 = vmatpush.msra.mxu0 0.0
    %270 = vmatpush.msra.mxu0 0.0
    %271 = vmatpush.msra.mxu0 0.0
    %272 = vmatpush.msra.mxu0 0.0
    %273 = vmatpush.msra.mxu0 0.0
    %274 = vmatpush.msra.mxu0 0.0
    %275 = vmatpush.msra.mxu0 0.0
    %276 = vmatpush.msra.mxu0 0.0
    %277 = vmatpush.msra.mxu0 0.0
    %278 = vmatpush.msra.mxu0 0.0
    %279 = vmatpush.msra.mxu0 0.0
    %280 = vmatpush.msra.mxu0 0.0
    %281 = vmatpush.msra.mxu0 0.0
    %282 = vmatpush.msra.mxu0 0.0
    %283 = vmatpush.msra.mxu0 0.0
    %284 = vmatpush.msra.mxu0 %v264
    %285 = vmatmul.f32.gmra.mxu0 %v267
    %v286 = vpop.f32.mrf.mxu0
    %v287 = vadd.f32 0.0, %v286
    %288 = vdwg.mxu0
    %289 = vrot.lane.b32.xlu0 %v173, 64
    %v290 = vpop.permute.xlu0 %289
    %v293 = vsel %vm240, %v262, 0
    %295 = vmatpush.msra.mxu0 0.0
    %296 = vmatpush.msra.mxu0 0.0
    %297 = vmatpush.msra.mxu0 0.0
    %298 = vmatpush.msra.mxu0 0.0
    %299 = vmatpush.msra.mxu0 0.0
    %300 = vmatpush.msra.mxu0 0.0
    %301 = vmatpush.msra.mxu0 0.0
    %302 = vmatpush.msra.mxu0 0.0
    %303 = vmatpush.msra.mxu0 0.0
    %304 = vmatpush.msra.mxu0 0.0
    %305 = vmatpush.msra.mxu0 0.0
    %306 = vmatpush.msra.mxu0 0.0
    %307 = vmatpush.msra.mxu0 0.0
    %308 = vmatpush.msra.mxu0 0.0
    %309 = vmatpush.msra.mxu0 0.0
    %310 = vmatpush.msra.mxu0 %v290
    %311 = vmatmul.f32.gmra.mxu0 %v293
    %v312 = vpop.f32.mrf.mxu0
    %v313 = vadd.f32 0.0, %v312
    %314 = vdwg.mxu0
    %315 = vrot.lane.b32.xlu0 %v170, 112
    %v316 = vpop.permute.xlu0 %315
    %317 = vrot.lane.b32.xlu0 %v170, 80
    %v318 = vpop.permute.xlu0 %317
    %v319 = vsel %vm178, %v316, 0
    %v321 = vsel %vm178, %v318, 0
    %323 = vmatpush.xpose.msra.mxu0 0.0
    %324 = vmatpush.xpose.msra.mxu0 0.0
    %325 = vmatpush.xpose.msra.mxu0 0.0
    %326 = vmatpush.xpose.msra.mxu0 0.0
    %327 = vmatpush.xpose.msra.mxu0 0.0
    %328 = vmatpush.xpose.msra.mxu0 0.0
    %329 = vmatpush.xpose.msra.mxu0 0.0
    %330 = vmatpush.xpose.msra.mxu0 0.0
    %331 = vmatpush.xpose.msra.mxu0 0.0
    %332 = vmatpush.xpose.msra.mxu0 0.0
    %333 = vmatpush.xpose.msra.mxu0 0.0
    %334 = vmatpush.xpose.msra.mxu0 0.0
    %335 = vmatpush.xpose.msra.mxu0 0.0
    %336 = vmatpush.xpose.msra.mxu0 0.0
    %337 = vmatpush.xpose.msra.mxu0 0.0
    %338 = vmatpush.xpose.msra.mxu0 %v321
    %339 = vmatmul.f32.gmra.mxu0 %v319
    %v340 = vpop.f32.mrf.mxu0
    %v341 = vadd.f32 0.0, %v340
    %342 = vdwg.mxu0
    %343 = vrot.lane.b32.xlu0 %v173, 112
    %v344 = vpop.permute.xlu0 %343
    %345 = vrot.lane.b32.xlu0 %v173, 80
    %v346 = vpop.permute.xlu0 %345
    %v347 = vsel %vm178, %v344, 0
    %v349 = vsel %vm178, %v346, 0
    %351 = vmatpush.xpose.msra.mxu0 0.0
    %352 = vmatpush.xpose.msra.mxu0 0.0
    %353 = vmatpush.xpose.msra.mxu0 0.0
    %354 = vmatpush.xpose.msra.mxu0 0.0
    %355 = vmatpush.xpose.msra.mxu0 0.0
    %356 = vmatpush.xpose.msra.mxu0 0.0
    %357 = vmatpush.xpose.msra.mxu0 0.0
    %358 = vmatpush.xpose.msra.mxu0 0.0
    %359 = vmatpush.xpose.msra.mxu0 0.0
    %360 = vmatpush.xpose.msra.mxu0 0.0
    %361 = vmatpush.xpose.msra.mxu0 0.0
    %362 = vmatpush.xpose.msra.mxu0 0.0
    %363 = vmatpush.xpose.msra.mxu0 0.0
    %364 = vmatpush.xpose.msra.mxu0 0.0
    %365 = vmatpush.xpose.msra.mxu0 0.0
    %366 = vmatpush.xpose.msra.mxu0 %v349
    %367 = vmatmul.f32.gmra.mxu0 %v347
    %v368 = vpop.f32.mrf.mxu0
    %v369 = vadd.f32 0.0, %v368
    %370 = vdwg.mxu0
    %v371 = vmul.f32 %v341, 0.25
    %v372 = vmul.f32 %v369, 0.25
    %v373 = vadd.f32 %v371, %v234
    %v374 = vadd.f32 %v372, %v235
    %v375 = vsel %vm240, %v373, -inf
    %376 = vmax.xlane.f32.xlu0 %v375
    %v377 = vpop.xlane.xlu0 %376
    %v378 = vsel %vm240, %v374, -inf
    %379 = vmax.xlane.f32.xlu0 %v378
    %v380 = vpop.xlane.xlu0 %379
    %v381 = vsub.f32 %v373, %v377
    %v382 = vsub.f32 %v374, %v380
    %v383 = vmul.f32 %v381, 1.442695
    %v384 = vpow.pop %v383
    %v385 = vmul.f32 %v382, 1.442695
    %v386 = vpow.pop %v385
    %v387 = vsel %vm240, %v384, 0.0
    %388 = vadd.xlane.f32.xlu0 %v387
    %v389 = vpop.xlane.xlu0 %388
    %v390 = vsel %vm240, %v386, 0.0
    %391 = vadd.xlane.f32.xlu0 %v390
    %v392 = vpop.xlane.xlu0 %391
    %v393 = vrcp.pop %v389
    %v394 = vrcp.pop %v392
    %v395 = vmul.f32 %v384, %v393
    %v396 = vmul.f32 %v386, %v394
    %397 = vrot.lane.b32.xlu0 %v170, 48
    %v398 = vpop.permute.xlu0 %397
    %v401 = vsel %vm240, %v395, 0
    %403 = vmatpush.msra.mxu0 0.0
    %404 = vmatpush.msra.mxu0 0.0
    %405 = vmatpush.msra.mxu0 0.0
    %406 = vmatpush.msra.mxu0 0.0
    %407 = vmatpush.msra.mxu0 0.0
    %408 = vmatpush.msra.mxu0 0.0
    %409 = vmatpush.msra.mxu0 0.0
    %410 = vmatpush.msra.mxu0 0.0
    %411 = vmatpush.msra.mxu0 0.0
    %412 = vmatpush.msra.mxu0 0.0
    %413 = vmatpush.msra.mxu0 0.0
    %414 = vmatpush.msra.mxu0 0.0
    %415 = vmatpush.msra.mxu0 0.0
    %416 = vmatpush.msra.mxu0 0.0
    %417 = vmatpush.msra.mxu0 0.0
    %418 = vmatpush.msra.mxu0 %v398
    %419 = vmatmul.f32.gmra.mxu0 %v401
    %v420 = vpop.f32.mrf.mxu0
    %v421 = vadd.f32 0.0, %v420
    %422 = vdwg.mxu0
    %423 = vrot.lane.b32.xlu0 %v173, 48
    %v424 = vpop.permute.xlu0 %423
    %v427 = vsel %vm240, %v396, 0
    %429 = vmatpush.msra.mxu0 0.0
    %430 = vmatpush.msra.mxu0 0.0
    %431 = vmatpush.msra.mxu0 0.0
    %432 = vmatpush.msra.mxu0 0.0
    %433 = vmatpush.msra.mxu0 0.0
    %434 = vmatpush.msra.mxu0 0.0
    %435 = vmatpush.msra.mxu0 0.0
    %436 = vmatpush.msra.mxu0 0.0
    %437 = vmatpush.msra.mxu0 0.0
    %438 = vmatpush.msra.mxu0 0.0
    %439 = vmatpush.msra.mxu0 0.0
    %440 = vmatpush.msra.mxu0 0.0
    %441 = vmatpush.msra.mxu0 0.0
    %442 = vmatpush.msra.mxu0 0.0
    %443 = vmatpush.msra.mxu0 0.0
    %444 = vmatpush.msra.mxu0 %v424
    %445 = vmatmul.f32.gmra.mxu0 %v427
    %v446 = vpop.f32.mrf.mxu0
    %v447 = vadd.f32 0.0, %v446
    %448 = vdwg.mxu0
    %451 = vrot.lane.b32.xlu0 %v421, 16
    %v452 = vpop.permute.xlu0 %451
    %453 = vrot.lane.b32.xlu0 %v447, 16
    %v454 = vpop.permute.xlu0 %453
    %v457 = vsel %vm178, %v287, %v452
    %v458 = vsel %vm178, %v313, %v454
    %v459 = vld [vmem:[%s9] sm:$0xff]
    %v460 = vld [vmem:[%s9 + $0x8] sm:$0xff]
    %v461 = vld [vmem:[%s9 + $0x10] sm:$0xff]
    %v462 = vld [vmem:[%s9 + $0x18] sm:$0xff]
    %v463 = vld [vmem:[%s10] sm:$0x1]
    %v465 = vperm.slane %v463, 0
    %v468 = vsel %vm73, %v457, 0
    %v471 = vsel %vm73, %v458, 0
    %473 = vmatpush.msra.mxu0 0.0
    %474 = vmatpush.msra.mxu0 0.0
    %475 = vmatpush.msra.mxu0 0.0
    %476 = vmatpush.msra.mxu0 0.0
    %477 = vmatpush.msra.mxu0 0.0
    %478 = vmatpush.msra.mxu0 0.0
    %479 = vmatpush.msra.mxu0 0.0
    %480 = vmatpush.msra.mxu0 0.0
    %481 = vmatpush.msra.mxu0 0.0
    %482 = vmatpush.msra.mxu0 0.0
    %483 = vmatpush.msra.mxu0 0.0
    %484 = vmatpush.msra.mxu0 0.0
    %485 = vmatpush.msra.mxu0 %v462
    %486 = vmatpush.msra.mxu0 %v461
    %487 = vmatpush.msra.mxu0 %v460
    %488 = vmatpush.msra.mxu0 %v459
    %489 = vmatmul.f32.gmra.mxu0 %v468
    %v490 = vpop.f32.mrf.mxu0
    %v491 = vadd.f32 %v465, %v490
    %492 = vmatmul.f32.gmra.mxu0 %v471
    %v493 = vpop.f32.mrf.mxu0
    %v494 = vadd.f32 %v465, %v493
    %495 = vdwg.mxu0
    %v496 = vadd.f32 %v129, %v491
    %v497 = vadd.f32 %v130, %v494
    %v498 = vsel %vm73, %v496, 0.0
    %499 = vadd.xlane.f32.xlu0 %v498
    %v500 = vpop.xlane.xlu0 %499
    %v501 = vsel %vm73, %v497, 0.0
    %502 = vadd.xlane.f32.xlu0 %v501
    %v503 = vpop.xlane.xlu0 %502
    %v504 = vmul.f32 %v500, %v86
    %v505 = vmul.f32 %v503, %v86
    %v506 = vsub.f32 %v496, %v504
    %v507 = vsub.f32 %v497, %v505
    %v508 = vmul.f32 %v506, %v506
    %v509 = vmul.f32 %v507, %v507
    %v510 = vsel %vm73, %v508, 0.0
    %511 = vadd.xlane.f32.xlu0 %v510
    %v512 = vpop.xlane.xlu0 %511
    %v513 = vsel %vm73, %v509, 0.0
    %514 = vadd.xlane.f32.xlu0 %v513
    %v515 = vpop.xlane.xlu0 %514
    %v516 = vmul.f32 %v512, %v86
    %v517 = vmul.f32 %v515, %v86
    %v518 = vadd.f32 %v516, 1e-12
    %v519 = vadd.f32 %v517, 1e-12
    %v520 = vrsqrt.pop %v518
    %v521 = vmul.f32 %v520, %v518
    %v522 = vmul.f32 %v521, %v520
    %v523 = vmul.f32 0.5, %v522
    %v524 = vsub.f32 1.5, %v523
    %v525 = vmul.f32 %v520, %v524
    %vm526 = vweird.f32 %v518
    %vm527 = vweird.f32 %v520
    %vm528 = vmor %vm526, %vm527
    %v529 = vsel %vm528, %v520, %v525
    %v530 = vrsqrt.pop %v519
    %v531 = vmul.f32 %v530, %v519
    %v532 = vmul.f32 %v531, %v530
    %v533 = vmul.f32 0.5, %v532
    %v534 = vsub.f32 1.5, %v533
    %v535 = vmul.f32 %v530, %v534
    %vm536 = vweird.f32 %v519
    %vm537 = vweird.f32 %v530
    %vm538 = vmor %vm536, %vm537
    %v539 = vsel %vm538, %v530, %v535
    %v540 = vmul.f32 %v506, %v529
    %v541 = vmul.f32 %v507, %v539
    %v542 = vperm.slane %v137, 0
    %v543 = vmul.f32 %v540, %v542
    %v544 = vmul.f32 %v541, %v542
    %v545 = vperm.slane %v137, 1
    %v546 = vadd.f32 %v543, %v545
    %v547 = vadd.f32 %v544, %v545
    %v548 = vld [vmem:[%s12] sm:$0xff]
    %v549 = vld [vmem:[%s12 + $0x8] sm:$0xff]
    %v550 = vld [vmem:[%s12 + $0x10] sm:$0xff]
    %v551 = vld [vmem:[%s12 + $0x18] sm:$0xff]
    %v552 = vld [vmem:[%s13] sm:$0x1]
    %v554 = vperm.slane %v552, 0
    %v557 = vsel %vm73, %v546, 0
    %v560 = vsel %vm73, %v547, 0
    %562 = vmatpush.msra.mxu0 0.0
    %563 = vmatpush.msra.mxu0 0.0
    %564 = vmatpush.msra.mxu0 0.0
    %565 = vmatpush.msra.mxu0 0.0
    %566 = vmatpush.msra.mxu0 0.0
    %567 = vmatpush.msra.mxu0 0.0
    %568 = vmatpush.msra.mxu0 0.0
    %569 = vmatpush.msra.mxu0 0.0
    %570 = vmatpush.msra.mxu0 0.0
    %571 = vmatpush.msra.mxu0 0.0
    %572 = vmatpush.msra.mxu0 0.0
    %573 = vmatpush.msra.mxu0 0.0
    %574 = vmatpush.msra.mxu0 %v551
    %575 = vmatpush.msra.mxu0 %v550
    %576 = vmatpush.msra.mxu0 %v549
    %577 = vmatpush.msra.mxu0 %v548
    %578 = vmatmul.f32.gmra.mxu0 %v557
    %v579 = vpop.f32.mrf.mxu0
    %v580 = vadd.f32 %v554, %v579
    %581 = vmatmul.f32.gmra.mxu0 %v560
    %v582 = vpop.f32.mrf.mxu0
    %v583 = vadd.f32 %v554, %v582
    %584 = vdwg.mxu0
    %v585 = vmul.f32 %v580, %v580
    %v586 = vmul.f32 %v583, %v583
    %v587 = vmul.f32 %v580, %v585
    %v588 = vmul.f32 %v583, %v586
    %v589 = vmul.f32 %v587, 0.044715
    %v590 = vmul.f32 %v588, 0.044715
    %v591 = vadd.f32 %v580, %v589
    %v592 = vadd.f32 %v583, %v590
    %v593 = vmul.f32 %v591, 0.7978846
    %v594 = vmul.f32 %v592, 0.7978846
    %v595 = vtanh.pop %v593
    %v596 = vtanh.pop %v594
    %v597 = vadd.f32 %v595, 1.0
    %v598 = vadd.f32 %v596, 1.0
    %v599 = vmul.f32 %v597, 0.5
    %v600 = vmul.f32 %v598, 0.5
    %v601 = vmul.f32 %v580, %v599
    %v602 = vmul.f32 %v583, %v600
    %v603 = vld [vmem:[%s14] sm:$0xff]
    %v604 = vld [vmem:[%s14 + $0x8] sm:$0xff]
    %v605 = vld [vmem:[%s14 + $0x10] sm:$0xff]
    %v606 = vld [vmem:[%s14 + $0x18] sm:$0xff]
    %v607 = vld [vmem:[%s14 + $0x20] sm:$0xff]
    %v608 = vld [vmem:[%s14 + $0x28] sm:$0xff]
    %v609 = vld [vmem:[%s14 + $0x30] sm:$0xff]
    %v610 = vld [vmem:[%s14 + $0x38] sm:$0xff]
    %v611 = vld [vmem:[%s15] sm:$0x1]
    %v613 = vperm.slane %v611, 0
    %vm615 = vcmask 523264
    %v617 = vsel %vm615, %v601, 0
    %v620 = vsel %vm615, %v602, 0
    %622 = vmatpush.msra.mxu0 0.0
    %623 = vmatpush.msra.mxu0 0.0
    %624 = vmatpush.msra.mxu0 0.0
    %625 = vmatpush.msra.mxu0 0.0
    %626 = vmatpush.msra.mxu0 0.0
    %627 = vmatpush.msra.mxu0 0.0
    %628 = vmatpush.msra.mxu0 0.0
    %629 = vmatpush.msra.mxu0 0.0
    %630 = vmatpush.msra.mxu0 %v610
    %631 = vmatpush.msra.mxu0 %v609
    %632 = vmatpush.msra.mxu0 %v608
    %633 = vmatpush.msra.mxu0 %v607
    %634 = vmatpush.msra.mxu0 %v606
    %635 = vmatpush.msra.mxu0 %v605
    %636 = vmatpush.msra.mxu0 %v604
    %637 = vmatpush.msra.mxu0 %v603
    %638 = vmatmul.f32.gmra.mxu0 %v617
    %v639 = vpop.f32.mrf.mxu0
    %v640 = vadd.f32 %v613, %v639
    %641 = vmatmul.f32.gmra.mxu0 %v620
    %v642 = vpop.f32.mrf.mxu0
    %v643 = vadd.f32 %v613, %v642
    %644 = vdwg.mxu0
    %v645 = vadd.f32 %v546, %v640
    %v646 = vadd.f32 %v547, %v643
    %v647 = vsel %vm73, %v645, 0.0
    %648 = vadd.xlane.f32.xlu0 %v647
    %v649 = vpop.xlane.xlu0 %648
    %v650 = vsel %vm73, %v646, 0.0
    %651 = vadd.xlane.f32.xlu0 %v650
    %v652 = vpop.xlane.xlu0 %651
    %v653 = vmul.f32 %v649, %v86
    %v654 = vmul.f32 %v652, %v86
    %v655 = vsub.f32 %v645, %v653
    %v656 = vsub.f32 %v646, %v654
    %v657 = vmul.f32 %v655, %v655
    %v658 = vmul.f32 %v656, %v656
    %v659 = vsel %vm73, %v657, 0.0
    %660 = vadd.xlane.f32.xlu0 %v659
    %v661 = vpop.xlane.xlu0 %660
    %v662 = vsel %vm73, %v658, 0.0
    %663 = vadd.xlane.f32.xlu0 %v662
    %v664 = vpop.xlane.xlu0 %663
    %v665 = vmul.f32 %v661, %v86
    %v666 = vmul.f32 %v664, %v86
    %v667 = vadd.f32 %v665, 1e-12
    %v668 = vadd.f32 %v666, 1e-12
    %v669 = vrsqrt.pop %v667
    %v670 = vmul.f32 %v669, %v667
    %v671 = vmul.f32 %v670, %v669
    %v672 = vmul.f32 0.5, %v671
    %v673 = vsub.f32 1.5, %v672
    %v674 = vmul.f32 %v669, %v673
    %vm675 = vweird.f32 %v667
    %vm676 = vweird.f32 %v669
    %vm677 = vmor %vm675, %vm676
    %v678 = vsel %vm677, %v669, %v674
    %v679 = vrsqrt.pop %v668
    %v680 = vmul.f32 %v679, %v668
    %v681 = vmul.f32 %v680, %v679
    %v682 = vmul.f32 0.5, %v681
    %v683 = vsub.f32 1.5, %v682
    %v684 = vmul.f32 %v679, %v683
    %vm685 = vweird.f32 %v668
    %vm686 = vweird.f32 %v679
    %vm687 = vmor %vm685, %vm686
    %v688 = vsel %vm687, %v679, %v684
    %v689 = vmul.f32 %v655, %v678
    %v690 = vmul.f32 %v656, %v688
    %v691 = vperm.slane %v137, 2
    %v692 = vmul.f32 %v689, %v691
    %v693 = vmul.f32 %v690, %v691
    %v694 = vperm.slane %v137, 3
    %v695 = vadd.f32 %v692, %v694
    %v696 = vadd.f32 %v693, %v694
    %s697 = scalar_lea.vmem %s11, 4
    %v698 = vld [vmem:[%s697] sm:$0xf]
    %s699 = scalar_lea.vmem %s7, 32
    %v700 = vld [vmem:[%s699] sm:$0xff]
    %v701 = vld [vmem:[%s699 + $0x8] sm:$0xff]
    %v702 = vld [vmem:[%s699 + $0x10] sm:$0xff]
    %v703 = vld [vmem:[%s699 + $0x18] sm:$0xff]
    %s704 = scalar_lea.vmem %s8, 1
    %v705 = vld [vmem:[%s704] sm:$0x1]
    %v707 = vperm.slane %v705, 0
    %v710 = vsel %vm73, %v695, 0
    %v713 = vsel %vm73, %v696, 0
    %715 = vmatpush.msra.mxu0 0.0
    %716 = vmatpush.msra.mxu0 0.0
    %717 = vmatpush.msra.mxu0 0.0
    %718 = vmatpush.msra.mxu0 0.0
    %719 = vmatpush.msra.mxu0 0.0
    %720 = vmatpush.msra.mxu0 0.0
    %721 = vmatpush.msra.mxu0 0.0
    %722 = vmatpush.msra.mxu0 0.0
    %723 = vmatpush.msra.mxu0 0.0
    %724 = vmatpush.msra.mxu0 0.0
    %725 = vmatpush.msra.mxu0 0.0
    %726 = vmatpush.msra.mxu0 0.0
    %727 = vmatpush.msra.mxu0 %v703
    %728 = vmatpush.msra.mxu0 %v702
    %729 = vmatpush.msra.mxu0 %v701
    %730 = vmatpush.msra.mxu0 %v700
    %731 = vmatmul.f32.gmra.mxu0 %v710
    %v732 = vpop.f32.mrf.mxu0
    %v733 = vadd.f32 %v707, %v732
    %734 = vmatmul.f32.gmra.mxu0 %v713
    %v735 = vpop.f32.mrf.mxu0
    %v736 = vadd.f32 %v707, %v735
    %737 = vdwg.mxu0
    %739 = vrot.lane.b32.xlu0 %v733, 96
    %v740 = vpop.permute.xlu0 %739
    %v741 = vsel %vm178, %v733, 0
    %v743 = vsel %vm178, %v740, 0
    %745 = vmatpush.xpose.msra.mxu0 0.0
    %746 = vmatpush.xpose.msra.mxu0 0.0
    %747 = vmatpush.xpose.msra.mxu0 0.0
    %748 = vmatpush.xpose.msra.mxu0 0.0
    %749 = vmatpush.xpose.msra.mxu0 0.0
    %750 = vmatpush.xpose.msra.mxu0 0.0
    %751 = vmatpush.xpose.msra.mxu0 0.0
    %752 = vmatpush.xpose.msra.mxu0 0.0
    %753 = vmatpush.xpose.msra.mxu0 0.0
    %754 = vmatpush.xpose.msra.mxu0 0.0
    %755 = vmatpush.xpose.msra.mxu0 0.0
    %756 = vmatpush.xpose.msra.mxu0 0.0
    %757 = vmatpush.xpose.msra.mxu0 0.0
    %758 = vmatpush.xpose.msra.mxu0 0.0
    %759 = vmatpush.xpose.msra.mxu0 0.0
    %760 = vmatpush.xpose.msra.mxu0 %v743
    %761 = vmatmul.f32.gmra.mxu0 %v741
    %v762 = vpop.f32.mrf.mxu0
    %v763 = vadd.f32 0.0, %v762
    %764 = vdwg.mxu0
    %766 = vrot.lane.b32.xlu0 %v736, 96
    %v767 = vpop.permute.xlu0 %766
    %v768 = vsel %vm178, %v736, 0
    %v770 = vsel %vm178, %v767, 0
    %772 = vmatpush.xpose.msra.mxu0 0.0
    %773 = vmatpush.xpose.msra.mxu0 0.0
    %774 = vmatpush.xpose.msra.mxu0 0.0
    %775 = vmatpush.xpose.msra.mxu0 0.0
    %776 = vmatpush.xpose.msra.mxu0 0.0
    %777 = vmatpush.xpose.msra.mxu0 0.0
    %778 = vmatpush.xpose.msra.mxu0 0.0
    %779 = vmatpush.xpose.msra.mxu0 0.0
    %780 = vmatpush.xpose.msra.mxu0 0.0
    %781 = vmatpush.xpose.msra.mxu0 0.0
    %782 = vmatpush.xpose.msra.mxu0 0.0
    %783 = vmatpush.xpose.msra.mxu0 0.0
    %784 = vmatpush.xpose.msra.mxu0 0.0
    %785 = vmatpush.xpose.msra.mxu0 0.0
    %786 = vmatpush.xpose.msra.mxu0 0.0
    %787 = vmatpush.xpose.msra.mxu0 %v770
    %788 = vmatmul.f32.gmra.mxu0 %v768
    %v789 = vpop.f32.mrf.mxu0
    %v790 = vadd.f32 0.0, %v789
    %791 = vdwg.mxu0
    %v792 = vmul.f32 %v763, 0.25
    %v793 = vmul.f32 %v790, 0.25
    %v794 = vadd.f32 %v792, %v234
    %v795 = vadd.f32 %v793, %v235
    %v796 = vsel %vm240, %v794, -inf
    %797 = vmax.xlane.f32.xlu0 %v796
    %v798 = vpop.xlane.xlu0 %797
    %v799 = vsel %vm240, %v795, -inf
    %800 = vmax.xlane.f32.xlu0 %v799
    %v801 = vpop.xlane.xlu0 %800
    %v802 = vsub.f32 %v794, %v798
    %v803 = vsub.f32 %v795, %v801
    %v804 = vmul.f32 %v802, 1.442695
    %v805 = vpow.pop %v804
    %v806 = vmul.f32 %v803, 1.442695
    %v807 = vpow.pop %v806
    %v808 = vsel %vm240, %v805, 0.0
    %809 = vadd.xlane.f32.xlu0 %v808
    %v810 = vpop.xlane.xlu0 %809
    %v811 = vsel %vm240, %v807, 0.0
    %812 = vadd.xlane.f32.xlu0 %v811
    %v813 = vpop.xlane.xlu0 %812
    %v814 = vrcp.pop %v810
    %v815 = vrcp.pop %v813
    %v816 = vmul.f32 %v805, %v814
    %v817 = vmul.f32 %v807, %v815
    %818 = vrot.lane.b32.xlu0 %v733, 64
    %v819 = vpop.permute.xlu0 %818
    %v822 = vsel %vm240, %v816, 0
    %824 = vmatpush.msra.mxu0 0.0
    %825 = vmatpush.msra.mxu0 0.0
    %826 = vmatpush.msra.mxu0 0.0
    %827 = vmatpush.msra.mxu0 0.0
    %828 = vmatpush.msra.mxu0 0.0
    %829 = vmatpush.msra.mxu0 0.0
    %830 = vmatpush.msra.mxu0 0.0
    %831 = vmatpush.msra.mxu0 0.0
    %832 = vmatpush.msra.mxu0 0.0
    %833 = vmatpush.msra.mxu0 0.0
    %834 = vmatpush.msra.mxu0 0.0
    %835 = vmatpush.msra.mxu0 0.0
    %836 = vmatpush.msra.mxu0 0.0
    %837 = vmatpush.msra.mxu0 0.0
    %838 = vmatpush.msra.mxu0 0.0
    %839 = vmatpush.msra.mxu0 %v819
    %840 = vmatmul.f32.gmra.mxu0 %v822
    %v841 = vpop.f32.mrf.mxu0
    %v842 = vadd.f32 0.0, %v841
    %843 = vdwg.mxu0
    %844 = vrot.lane.b32.xlu0 %v736, 64
    %v845 = vpop.permute.xlu0 %844
    %v848 = vsel %vm240, %v817, 0
    %850 = vmatpush.msra.mxu0 0.0
    %851 = vmatpush.msra.mxu0 0.0
    %852 = vmatpush.msra.mxu0 0.0
    %853 = vmatpush.msra.mxu0 0.0
    %854 = vmatpush.msra.mxu0 0.0
    %855 = vmatpush.msra.mxu0 0.0
    %856 = vmatpush.msra.mxu0 0.0
    %857 = vmatpush.msra.mxu0 0.0
    %858 = vmatpush.msra.mxu0 0.0
    %859 = vmatpush.msra.mxu0 0.0
    %860 = vmatpush.msra.mxu0 0.0
    %861 = vmatpush.msra.mxu0 0.0
    %862 = vmatpush.msra.mxu0 0.0
    %863 = vmatpush.msra.mxu0 0.0
    %864 = vmatpush.msra.mxu0 0.0
    %865 = vmatpush.msra.mxu0 %v845
    %866 = vmatmul.f32.gmra.mxu0 %v848
    %v867 = vpop.f32.mrf.mxu0
    %v868 = vadd.f32 0.0, %v867
    %869 = vdwg.mxu0
    %870 = vrot.lane.b32.xlu0 %v733, 112
    %v871 = vpop.permute.xlu0 %870
    %872 = vrot.lane.b32.xlu0 %v733, 80
    %v873 = vpop.permute.xlu0 %872
    %v874 = vsel %vm178, %v871, 0
    %v876 = vsel %vm178, %v873, 0
    %878 = vmatpush.xpose.msra.mxu0 0.0
    %879 = vmatpush.xpose.msra.mxu0 0.0
    %880 = vmatpush.xpose.msra.mxu0 0.0
    %881 = vmatpush.xpose.msra.mxu0 0.0
    %882 = vmatpush.xpose.msra.mxu0 0.0
    %883 = vmatpush.xpose.msra.mxu0 0.0
    %884 = vmatpush.xpose.msra.mxu0 0.0
    %885 = vmatpush.xpose.msra.mxu0 0.0
    %886 = vmatpush.xpose.msra.mxu0 0.0
    %887 = vmatpush.xpose.msra.mxu0 0.0
    %888 = vmatpush.xpose.msra.mxu0 0.0
    %889 = vmatpush.xpose.msra.mxu0 0.0
    %890 = vmatpush.xpose.msra.mxu0 0.0
    %891 = vmatpush.xpose.msra.mxu0 0.0
    %892 = vmatpush.xpose.msra.mxu0 0.0
    %893 = vmatpush.xpose.msra.mxu0 %v876
    %894 = vmatmul.f32.gmra.mxu0 %v874
    %v895 = vpop.f32.mrf.mxu0
    %v896 = vadd.f32 0.0, %v895
    %897 = vdwg.mxu0
    %898 = vrot.lane.b32.xlu0 %v736, 112
    %v899 = vpop.permute.xlu0 %898
    %900 = vrot.lane.b32.xlu0 %v736, 80
    %v901 = vpop.permute.xlu0 %900
    %v902 = vsel %vm178, %v899, 0
    %v904 = vsel %vm178, %v901, 0
    %906 = vmatpush.xpose.msra.mxu0 0.0
    %907 = vmatpush.xpose.msra.mxu0 0.0
    %908 = vmatpush.xpose.msra.mxu0 0.0
    %909 = vmatpush.xpose.msra.mxu0 0.0
    %910 = vmatpush.xpose.msra.mxu0 0.0
    %911 = vmatpush.xpose.msra.mxu0 0.0
    %912 = vmatpush.xpose.msra.mxu0 0.0
    %913 = vmatpush.xpose.msra.mxu0 0.0
    %914 = vmatpush.xpose.msra.mxu0 0.0
    %915 = vmatpush.xpose.msra.mxu0 0.0
    %916 = vmatpush.xpose.msra.mxu0 0.0
    %917 = vmatpush.xpose.msra.mxu0 0.0
    %918 = vmatpush.xpose.msra.mxu0 0.0
    %919 = vmatpush.xpose.msra.mxu0 0.0
    %920 = vmatpush.xpose.msra.mxu0 0.0
    %921 = vmatpush.xpose.msra.mxu0 %v904
    %922 = vmatmul.f32.gmra.mxu0 %v902
    %v923 = vpop.f32.mrf.mxu0
    %v924 = vadd.f32 0.0, %v923
    %925 = vdwg.mxu0
    %v926 = vmul.f32 %v896, 0.25
    %v927 = vmul.f32 %v924, 0.25
    %v928 = vadd.f32 %v926, %v234
    %v929 = vadd.f32 %v927, %v235
    %v930 = vsel %vm240, %v928, -inf
    %931 = vmax.xlane.f32.xlu0 %v930
    %v932 = vpop.xlane.xlu0 %931
    %v933 = vsel %vm240, %v929, -inf
    %934 = vmax.xlane.f32.xlu0 %v933
    %v935 = vpop.xlane.xlu0 %934
    %v936 = vsub.f32 %v928, %v932
    %v937 = vsub.f32 %v929, %v935
    %v938 = vmul.f32 %v936, 1.442695
    %v939 = vpow.pop %v938
    %v940 = vmul.f32 %v937, 1.442695
    %v941 = vpow.pop %v940
    %v942 = vsel %vm240, %v939, 0.0
    %943 = vadd.xlane.f32.xlu0 %v942
    %v944 = vpop.xlane.xlu0 %943
    %v945 = vsel %vm240, %v941, 0.0
    %946 = vadd.xlane.f32.xlu0 %v945
    %v947 = vpop.xlane.xlu0 %946
    %v948 = vrcp.pop %v944
    %v949 = vrcp.pop %v947
    %v950 = vmul.f32 %v939, %v948
    %v951 = vmul.f32 %v941, %v949
    %952 = vrot.lane.b32.xlu0 %v733, 48
    %v953 = vpop.permute.xlu0 %952
    %v956 = vsel %vm240, %v950, 0
    %958 = vmatpush.msra.mxu0 0.0
    %959 = vmatpush.msra.mxu0 0.0
    %960 = vmatpush.msra.mxu0 0.0
    %961 = vmatpush.msra.mxu0 0.0
    %962 = vmatpush.msra.mxu0 0.0
    %963 = vmatpush.msra.mxu0 0.0
    %964 = vmatpush.msra.mxu0 0.0
    %965 = vmatpush.msra.mxu0 0.0
    %966 = vmatpush.msra.mxu0 0.0
    %967 = vmatpush.msra.mxu0 0.0
    %968 = vmatpush.msra.mxu0 0.0
    %969 = vmatpush.msra.mxu0 0.0
    %970 = vmatpush.msra.mxu0 0.0
    %971 = vmatpush.msra.mxu0 0.0
    %972 = vmatpush.msra.mxu0 0.0
    %973 = vmatpush.msra.mxu0 %v953
    %974 = vmatmul.f32.gmra.mxu0 %v956
    %v975 = vpop.f32.mrf.mxu0
    %v976 = vadd.f32 0.0, %v975
    %977 = vdwg.mxu0
    %978 = vrot.lane.b32.xlu0 %v736, 48
    %v979 = vpop.permute.xlu0 %978
    %v982 = vsel %vm240, %v951, 0
    %984 = vmatpush.msra.mxu0 0.0
    %985 = vmatpush.msra.mxu0 0.0
    %986 = vmatpush.msra.mxu0 0.0
    %987 = vmatpush.msra.mxu0 0.0
    %988 = vmatpush.msra.mxu0 0.0
    %989 = vmatpush.msra.mxu0 0.0
    %990 = vmatpush.msra.mxu0 0.0
    %991 = vmatpush.msra.mxu0 0.0
    %992 = vmatpush.msra.mxu0 0.0
    %993 = vmatpush.msra.mxu0 0.0
    %994 = vmatpush.msra.mxu0 0.0
    %995 = vmatpush.msra.mxu0 0.0
    %996 = vmatpush.msra.mxu0 0.0
    %997 = vmatpush.msra.mxu0 0.0
    %998 = vmatpush.msra.mxu0 0.0
    %999 = vmatpush.msra.mxu0 %v979
    %1000 = vmatmul.f32.gmra.mxu0 %v982
    %v1001 = vpop.f32.mrf.mxu0
    %v1002 = vadd.f32 0.0, %v1001
    %1003 = vdwg.mxu0
    %1006 = vrot.lane.b32.xlu0 %v976, 16
    %v1007 = vpop.permute.xlu0 %1006
    %1008 = vrot.lane.b32.xlu0 %v1002, 16
    %v1009 = vpop.permute.xlu0 %1008
    %v1012 = vsel %vm178, %v842, %v1007
    %v1013 = vsel %vm178, %v868, %v1009
    %s1014 = scalar_lea.vmem %s9, 32
    %v1015 = vld [vmem:[%s1014] sm:$0xff]
    %v1016 = vld [vmem:[%s1014 + $0x8] sm:$0xff]
    %v1017 = vld [vmem:[%s1014 + $0x10] sm:$0xff]
    %v1018 = vld [vmem:[%s1014 + $0x18] sm:$0xff]
    %s1019 = scalar_lea.vmem %s10, 1
    %v1020 = vld [vmem:[%s1019] sm:$0x1]
    %v1022 = vperm.slane %v1020, 0
    %v1025 = vsel %vm73, %v1012, 0
    %v1028 = vsel %vm73, %v1013, 0
    %1030 = vmatpush.msra.mxu0 0.0
    %1031 = vmatpush.msra.mxu0 0.0
    %1032 = vmatpush.msra.mxu0 0.0
    %1033 = vmatpush.msra.mxu0 0.0
    %1034 = vmatpush.msra.mxu0 0.0
    %1035 = vmatpush.msra.mxu0 0.0
    %1036 = vmatpush.msra.mxu0 0.0
    %1037 = vmatpush.msra.mxu0 0.0
    %1038 = vmatpush.msra.mxu0 0.0
    %1039 = vmatpush.msra.mxu0 0.0
    %1040 = vmatpush.msra.mxu0 0.0
    %1041 = vmatpush.msra.mxu0 0.0
    %1042 = vmatpush.msra.mxu0 %v1018
    %1043 = vmatpush.msra.mxu0 %v1017
    %1044 = vmatpush.msra.mxu0 %v1016
    %1045 = vmatpush.msra.mxu0 %v1015
    %1046 = vmatmul.f32.gmra.mxu0 %v1025
    %v1047 = vpop.f32.mrf.mxu0
    %v1048 = vadd.f32 %v1022, %v1047
    %1049 = vmatmul.f32.gmra.mxu0 %v1028
    %v1050 = vpop.f32.mrf.mxu0
    %v1051 = vadd.f32 %v1022, %v1050
    %1052 = vdwg.mxu0
    %v1053 = vadd.f32 %v695, %v1048
    %v1054 = vadd.f32 %v696, %v1051
    %v1055 = vsel %vm73, %v1053, 0.0
    %1056 = vadd.xlane.f32.xlu0 %v1055
    %v1057 = vpop.xlane.xlu0 %1056
    %v1058 = vsel %vm73, %v1054, 0.0
    %1059 = vadd.xlane.f32.xlu0 %v1058
    %v1060 = vpop.xlane.xlu0 %1059
    %v1061 = vmul.f32 %v1057, %v86
    %v1062 = vmul.f32 %v1060, %v86
    %v1063 = vsub.f32 %v1053, %v1061
    %v1064 = vsub.f32 %v1054, %v1062
    %v1065 = vmul.f32 %v1063, %v1063
    %v1066 = vmul.f32 %v1064, %v1064
    %v1067 = vsel %vm73, %v1065, 0.0
    %1068 = vadd.xlane.f32.xlu0 %v1067
    %v1069 = vpop.xlane.xlu0 %1068
    %v1070 = vsel %vm73, %v1066, 0.0
    %1071 = vadd.xlane.f32.xlu0 %v1070
    %v1072 = vpop.xlane.xlu0 %1071
    %v1073 = vmul.f32 %v1069, %v86
    %v1074 = vmul.f32 %v1072, %v86
    %v1075 = vadd.f32 %v1073, 1e-12
    %v1076 = vadd.f32 %v1074, 1e-12
    %v1077 = vrsqrt.pop %v1075
    %v1078 = vmul.f32 %v1077, %v1075
    %v1079 = vmul.f32 %v1078, %v1077
    %v1080 = vmul.f32 0.5, %v1079
    %v1081 = vsub.f32 1.5, %v1080
    %v1082 = vmul.f32 %v1077, %v1081
    %vm1083 = vweird.f32 %v1075
    %vm1084 = vweird.f32 %v1077
    %vm1085 = vmor %vm1083, %vm1084
    %v1086 = vsel %vm1085, %v1077, %v1082
    %v1087 = vrsqrt.pop %v1076
    %v1088 = vmul.f32 %v1087, %v1076
    %v1089 = vmul.f32 %v1088, %v1087
    %v1090 = vmul.f32 0.5, %v1089
    %v1091 = vsub.f32 1.5, %v1090
    %v1092 = vmul.f32 %v1087, %v1091
    %vm1093 = vweird.f32 %v1076
    %vm1094 = vweird.f32 %v1087
    %vm1095 = vmor %vm1093, %vm1094
    %v1096 = vsel %vm1095, %v1087, %v1092
    %v1097 = vmul.f32 %v1063, %v1086
    %v1098 = vmul.f32 %v1064, %v1096
    %v1099 = vperm.slane %v698, 0
    %v1100 = vmul.f32 %v1097, %v1099
    %v1101 = vmul.f32 %v1098, %v1099
    %v1102 = vperm.slane %v698, 1
    %v1103 = vadd.f32 %v1100, %v1102
    %v1104 = vadd.f32 %v1101, %v1102
    %s1105 = scalar_lea.vmem %s12, 32
    %v1106 = vld [vmem:[%s1105] sm:$0xff]
    %v1107 = vld [vmem:[%s1105 + $0x8] sm:$0xff]
    %v1108 = vld [vmem:[%s1105 + $0x10] sm:$0xff]
    %v1109 = vld [vmem:[%s1105 + $0x18] sm:$0xff]
    %s1110 = scalar_lea.vmem %s13, 1
    %v1111 = vld [vmem:[%s1110] sm:$0x1]
    %v1113 = vperm.slane %v1111, 0
    %v1116 = vsel %vm73, %v1103, 0
    %v1119 = vsel %vm73, %v1104, 0
    %1121 = vmatpush.msra.mxu0 0.0
    %1122 = vmatpush.msra.mxu0 0.0
    %1123 = vmatpush.msra.mxu0 0.0
    %1124 = vmatpush.msra.mxu0 0.0
    %1125 = vmatpush.msra.mxu0 0.0
    %1126 = vmatpush.msra.mxu0 0.0
    %1127 = vmatpush.msra.mxu0 0.0
    %1128 = vmatpush.msra.mxu0 0.0
    %1129 = vmatpush.msra.mxu0 0.0
    %1130 = vmatpush.msra.mxu0 0.0
    %1131 = vmatpush.msra.mxu0 0.0
    %1132 = vmatpush.msra.mxu0 0.0
    %1133 = vmatpush.msra.mxu0 %v1109
    %1134 = vmatpush.msra.mxu0 %v1108
    %1135 = vmatpush.msra.mxu0 %v1107
    %1136 = vmatpush.msra.mxu0 %v1106
    %1137 = vmatmul.f32.gmra.mxu0 %v1116
    %v1138 = vpop.f32.mrf.mxu0
    %v1139 = vadd.f32 %v1113, %v1138
    %1140 = vmatmul.f32.gmra.mxu0 %v1119
    %v1141 = vpop.f32.mrf.mxu0
    %v1142 = vadd.f32 %v1113, %v1141
    %1143 = vdwg.mxu0
    %v1144 = vmul.f32 %v1139, %v1139
    %v1145 = vmul.f32 %v1142, %v1142
    %v1146 = vmul.f32 %v1139, %v1144
    %v1147 = vmul.f32 %v1142, %v1145
    %v1148 = vmul.f32 %v1146, 0.044715
    %v1149 = vmul.f32 %v1147, 0.044715
    %v1150 = vadd.f32 %v1139, %v1148
    %v1151 = vadd.f32 %v1142, %v1149
    %v1152 = vmul.f32 %v1150, 0.7978846
    %v1153 = vmul.f32 %v1151, 0.7978846
    %v1154 = vtanh.pop %v1152
    %v1155 = vtanh.pop %v1153
    %v1156 = vadd.f32 %v1154, 1.0
    %v1157 = vadd.f32 %v1155, 1.0
    %v1158 = vmul.f32 %v1156, 0.5
    %v1159 = vmul.f32 %v1157, 0.5
    %v1160 = vmul.f32 %v1139, %v1158
    %v1161 = vmul.f32 %v1142, %v1159
    %s1162 = scalar_lea.vmem %s14, 64
    %v1163 = vld [vmem:[%s1162] sm:$0xff]
    %v1164 = vld [vmem:[%s1162 + $0x8] sm:$0xff]
    %v1165 = vld [vmem:[%s1162 + $0x10] sm:$0xff]
    %v1166 = vld [vmem:[%s1162 + $0x18] sm:$0xff]
    %v1167 = vld [vmem:[%s1162 + $0x20] sm:$0xff]
    %v1168 = vld [vmem:[%s1162 + $0x28] sm:$0xff]
    %v1169 = vld [vmem:[%s1162 + $0x30] sm:$0xff]
    %v1170 = vld [vmem:[%s1162 + $0x38] sm:$0xff]
    %s1171 = scalar_lea.vmem %s15, 1
    %v1172 = vld [vmem:[%s1171] sm:$0x1]
    %v1174 = vperm.slane %v1172, 0
    %v1177 = vsel %vm615, %v1160, 0
    %v1180 = vsel %vm615, %v1161, 0
    %1182 = vmatpush.msra.mxu0 0.0
    %1183 = vmatpush.msra.mxu0 0.0
    %1184 = vmatpush.msra.mxu0 0.0
    %1185 = vmatpush.msra.mxu0 0.0
    %1186 = vmatpush.msra.mxu0 0.0
    %1187 = vmatpush.msra.mxu0 0.0
    %1188 = vmatpush.msra.mxu0 0.0
    %1189 = vmatpush.msra.mxu0 0.0
    %1190 = vmatpush.msra.mxu0 %v1170
    %1191 = vmatpush.msra.mxu0 %v1169
    %1192 = vmatpush.msra.mxu0 %v1168
    %1193 = vmatpush.msra.mxu0 %v1167
    %1194 = vmatpush.msra.mxu0 %v1166
    %1195 = vmatpush.msra.mxu0 %v1165
    %1196 = vmatpush.msra.mxu0 %v1164
    %1197 = vmatpush.msra.mxu0 %v1163
    %1198 = vmatmul.f32.gmra.mxu0 %v1177
    %v1199 = vpop.f32.mrf.mxu0
    %v1200 = vadd.f32 %v1174, %v1199
    %1201 = vmatmul.f32.gmra.mxu0 %v1180
    %v1202 = vpop.f32.mrf.mxu0
    %v1203 = vadd.f32 %v1174, %v1202
    %1204 = vdwg.mxu0
    %v1205 = vadd.f32 %v1103, %v1200
    %v1206 = vadd.f32 %v1104, %v1203
    %v1207 = vsel %vm73, %v1205, 0.0
    %1208 = vadd.xlane.f32.xlu0 %v1207
    %v1209 = vpop.xlane.xlu0 %1208
    %v1210 = vsel %vm73, %v1206, 0.0
    %1211 = vadd.xlane.f32.xlu0 %v1210
    %v1212 = vpop.xlane.xlu0 %1211
    %v1213 = vmul.f32 %v1209, %v86
    %v1214 = vmul.f32 %v1212, %v86
    %v1215 = vsub.f32 %v1205, %v1213
    %v1216 = vsub.f32 %v1206, %v1214
    %v1217 = vmul.f32 %v1215, %v1215
    %v1218 = vmul.f32 %v1216, %v1216
    %v1219 = vsel %vm73, %v1217, 0.0
    %1220 = vadd.xlane.f32.xlu0 %v1219
    %v1221 = vpop.xlane.xlu0 %1220
    %v1222 = vsel %vm73, %v1218, 0.0
    %1223 = vadd.xlane.f32.xlu0 %v1222
    %v1224 = vpop.xlane.xlu0 %1223
    %v1225 = vmul.f32 %v1221, %v86
    %v1226 = vmul.f32 %v1224, %v86
    %v1227 = vadd.f32 %v1225, 1e-12
    %v1228 = vadd.f32 %v1226, 1e-12
    %v1229 = vrsqrt.pop %v1227
    %v1230 = vmul.f32 %v1229, %v1227
    %v1231 = vmul.f32 %v1230, %v1229
    %v1232 = vmul.f32 0.5, %v1231
    %v1233 = vsub.f32 1.5, %v1232
    %v1234 = vmul.f32 %v1229, %v1233
    %vm1235 = vweird.f32 %v1227
    %vm1236 = vweird.f32 %v1229
    %vm1237 = vmor %vm1235, %vm1236
    %v1238 = vsel %vm1237, %v1229, %v1234
    %v1239 = vrsqrt.pop %v1228
    %v1240 = vmul.f32 %v1239, %v1228
    %v1241 = vmul.f32 %v1240, %v1239
    %v1242 = vmul.f32 0.5, %v1241
    %v1243 = vsub.f32 1.5, %v1242
    %v1244 = vmul.f32 %v1239, %v1243
    %vm1245 = vweird.f32 %v1228
    %vm1246 = vweird.f32 %v1239
    %vm1247 = vmor %vm1245, %vm1246
    %v1248 = vsel %vm1247, %v1239, %v1244
    %v1249 = vmul.f32 %v1215, %v1238
    %v1250 = vmul.f32 %v1216, %v1248
    %v1251 = vperm.slane %v698, 2
    %v1252 = vmul.f32 %v1249, %v1251
    %v1253 = vmul.f32 %v1250, %v1251
    %v1254 = vperm.slane %v698, 3
    %v1255 = vadd.f32 %v1252, %v1254
    %v1256 = vadd.f32 %v1253, %v1254
    %v1257 = vld [vmem:[%s16] sm:$0xff]
    %v1258 = vld [vmem:[%s16 + $0x8] sm:$0xff]
    %v1259 = vld [vmem:[%s16 + $0x10] sm:$0xff]
    %v1260 = vld [vmem:[%s16 + $0x18] sm:$0xff]
    %v1261 = vld [vmem:[%s17] sm:$0x1]
    %v1263 = vperm.slane %v1261, 0
    %v1266 = vsel %vm73, %v1255, 0
    %v1269 = vsel %vm73, %v1256, 0
    %1271 = vmatpush.msra.mxu0 0.0
    %1272 = vmatpush.msra.mxu0 0.0
    %1273 = vmatpush.msra.mxu0 0.0
    %1274 = vmatpush.msra.mxu0 0.0
    %1275 = vmatpush.msra.mxu0 0.0
    %1276 = vmatpush.msra.mxu0 0.0
    %1277 = vmatpush.msra.mxu0 0.0
    %1278 = vmatpush.msra.mxu0 0.0
    %1279 = vmatpush.msra.mxu0 0.0
    %1280 = vmatpush.msra.mxu0 0.0
    %1281 = vmatpush.msra.mxu0 0.0
    %1282 = vmatpush.msra.mxu0 0.0
    %1283 = vmatpush.msra.mxu0 %v1260
    %1284 = vmatpush.msra.mxu0 %v1259
    %1285 = vmatpush.msra.mxu0 %v1258
    %1286 = vmatpush.msra.mxu0 %v1257
    %1287 = vmatmul.f32.gmra.mxu0 %v1266
    %v1288 = vpop.f32.mrf.mxu0
    %v1289 = vadd.f32 %v1263, %v1288
    %1290 = vmatmul.f32.gmra.mxu0 %v1269
    %v1291 = vpop.f32.mrf.mxu0
    %v1292 = vadd.f32 %v1263, %v1291
    %1293 = vdwg.mxu0
    %1294 = vst [vmem:[%s18] sm:$0xff] %v1289
    %1295 = vst [vmem:[%s18 + $0x8] sm:$0xff] %v1292
    %1296 = vmax.xlane.f32.xlu0 %v1289
    %v1297 = vpop.xlane.xlu0 %1296
    %1298 = vmax.xlane.f32.xlu0 %v1292
    %v1299 = vpop.xlane.xlu0 %1298
    %v1300 = vsub.f32 %v1289, %v1297
    %v1301 = vsub.f32 %v1292, %v1299
    %v1302 = vmul.f32 %v1300, 1.442695
    %v1303 = vpow.pop %v1302
    %v1304 = vmul.f32 %v1301, 1.442695
    %v1305 = vpow.pop %v1304
    %1306 = vadd.xlane.f32.xlu0 %v1303
    %v1307 = vpop.xlane.xlu0 %1306
    %1308 = vadd.xlane.f32.xlu0 %v1305
    %v1309 = vpop.xlane.xlu0 %1308
    %v1310 = vlog2.pop %v1307
    %v1311 = vmul.f32 %v1310, 0.6931472
    %v1312 = vlog2.pop %v1309
    %v1313 = vmul.f32 %v1312, 0.6931472
    %v1314 = vadd.f32 %v1297, %v1311
    %v1315 = vadd.f32 %v1299, %v1313
    %v1316 = vld [vmem:[%s6] sm:$0xff]
    %v1317 = vld [vmem:[%s6 + $0x8] sm:$0xff]
    %v1318 = vlaneseq
    %v1319 = vand.u32 %v1318, 127
    %1320 = vset.pattern.permute.xlu0 0
    %1321 = vperm.xlu0 %1320, %v1316
    %v1322 = vpop.permute.xlu0 %1321
    %1323 = vset.pattern.permute.xlu0 0
    %1324 = vperm.xlu0 %1323, %v1317
    %v1325 = vpop.permute.xlu0 %1324
    %vm1326 = vcmp.eq.s32.totalorder %v1319, %v1322
    %vm1327 = vcmp.eq.s32.totalorder %v1319, %v1325
    %v1328 = vsel %vm1326, %v1289, 0.0
    %v1329 = vsel %vm1327, %v1292, 0.0
    %1330 = vadd.xlane.f32.xlu0 %v1328
    %v1331 = vpop.xlane.xlu0 %1330
    %1332 = vadd.xlane.f32.xlu0 %v1329
    %v1333 = vpop.xlane.xlu0 %1332
    %v1334 = vld [vmem:[%s5] sm:$0xff]
    %v1335 = vld [vmem:[%s5 + $0x8] sm:$0xff]
    %v1336 = vsub.f32 %v1314, %v1331
    %v1337 = vsub.f32 %v1315, %v1333
    %v1338 = vmul.f32 %v1336, %v1334
    %v1339 = vmul.f32 %v1337, %v1335
    %vm1340 = vcmask 7168
    %v1341 = vsel %vm1340, %v1338, 0.0
    %v1342 = vsel %vm1340, %v1339, 0.0
    %v1343 = vadd.f32 %v1341, %v1342
    %1344 = vadd.xlane.f32.xlu0 %v1343
    %v1345 = vpop.xlane.xlu0 %1344
    %v1346 = vrot.slane %v1345, 4
    %v1347 = vadd.f32 %v1345, %v1346
    %v1348 = vrot.slane %v1347, 2
    %v1349 = vadd.f32 %v1347, %v1348
    %v1350 = vrot.slane %v1349, 1
    %v1351 = vadd.f32 %v1349, %v1350
    %s1352 = vtos %v1351
    %v1353 = vstv %s1352
    %v1354 = vsel %vm1340, %v1334, 0.0
    %v1355 = vsel %vm1340, %v1335, 0.0
    %v1356 = vadd.f32 %v1354, %v1355
    %1357 = vadd.xlane.f32.xlu0 %v1356
    %v1358 = vpop.xlane.xlu0 %1357
    %v1359 = vrot.slane %v1358, 4
    %v1360 = vadd.f32 %v1358, %v1359
    %v1361 = vrot.slane %v1360, 2
    %v1362 = vadd.f32 %v1360, %v1361
    %v1363 = vrot.slane %v1362, 1
    %v1364 = vadd.f32 %v1362, %v1363
    %s1365 = vtos %v1364
    %v1366 = vstv %s1365
    %v1367 = vrcp.pop %v1366
    %v1368 = vmul.f32 %v1366, %v1367
    %v1369 = vsub.f32 1.0, %v1368
    %v1370 = vmul.f32 %v1367, %v1369
    %v1371 = vadd.f32 %v1367, %v1370
    %vm1372 = vweird.f32 %v1366
    %vm1373 = vweird.f32 %v1367
    %vm1374 = vmor %vm1372, %vm1373
    %v1375 = vsel %vm1374, %v1367, %v1371
    %v1376 = vand.u32 2147483647, %v1366
    %vm1377 = vcmp.eq.f32.partialorder %v1376, 8.507059e+37
    %v1378 = vand.u32 %v1366, 2147483648
    %v1379 = vor.u32 1.1754944e-38, %v1378
    %v1380 = vsel %vm1377, %v1379, %v1375
    %v1381 = vmul.f32 %v1353, %v1380
    %vm1382 = vcmask 0
    %1383 = vst.msk [vmem:[#allocation2] sm:$0x1] %vm1382, %v1381
    // Predicated region
    $region74: #{_lambda_.1} parent=1 // pred_check
      _
    $region75: #{_lambda_.1} parent=1 // pred_check_branch
      %1385 = sbr.rel (0) target = $region77
    $region76: #{_lambda_.1} parent=1 // pred_region
      _
    $region77: #{_lambda_.1} parent=1 // pred_fallthru
      _
    // Predicated region
    $region78: #{_lambda_.1} parent=1 // pred_check
      _
    $region79: #{_lambda_.1} parent=1 // pred_check_branch
      %1387 = sbr.rel (0) target = $region81
    $region80: #{_lambda_.1} parent=1 // pred_region
      %1389 = vsyncadd [#allocation3], 0
      %s1391 = sshll.u32 [#allocation2], 4
      %s1392 = int_to_ptr.vmem [resolvable:$true] %s1391
      %s1393 = sshll.u32 %s19, 4
      %s1394 = int_to_ptr.hbm [resolvable:$true] %s1393
      %1396 = dma.vmem_to_hbm [thread:$0]  %s1392, 16, %s1394, [#allocation3]
    $region81: #{_lambda_.1} parent=1 // pred_fallthru
      _
    // Predicated region
    $region82: #{_lambda_.1} parent=1 // pred_check
      _
    $region83: #{_lambda_.1} parent=1 // pred_check_branch
      %1398 = sbr.rel (0) target = $region85
    $region84: #{_lambda_.1} parent=1 // pred_region
      _
    $region85: #{_lambda_.1} parent=1 // pred_fallthru
      _
    // Predicated region
    $region86: #{_lambda_.1} parent=1 // pred_check
      _
    $region87: #{_lambda_.1} parent=1 // pred_check_branch
      %1400 = sbr.rel (0) target = $region89
    $region88: #{_lambda_.1} parent=1 // pred_region
      %1402 = dma.done [#allocation3], 16
    $region89: #{_lambda_.1} parent=1 // pred_fallthru
      _
    %1403 = vsyncpa [#allocation3], 1

</llo_original>
